<compile_context>
chip_gen: v7x
topology: tpu7x:2x2x1
jax: 0.10.0
libtpu: 0.0.40
codegen_flags: <defaults>
</compile_context>

<pallas_src>
import jax
import jax.numpy as jnp
from jax.experimental import pallas as pl
from jax.experimental.pallas import tpu as pltpu

HIDDEN_LAYERS = [400, 300]
NUM_INPUT = 784
NUM_OUTPUT = 10

LANE = 128


def _round_up(n, m):
    return ((n + m - 1) // m) * m


# Lane-padded feature dims (zero padding is exact: pad rows/cols are 0, ReLU(0)=0).
D_IN_P = _round_up(NUM_INPUT, LANE)        # 896
H1_P = _round_up(HIDDEN_LAYERS[0], LANE)   # 512
H2_P = _round_up(HIDDEN_LAYERS[1], LANE)   # 384
D_OUT_P = _round_up(NUM_OUTPUT, LANE)      # 128  (lane-dense output stores)


def _mlp_kernel(x_ref, w1_ref, b1_ref, w2_ref, b2_ref, w3_ref, b3_ref, o_ref, xp_ref):
    # Cast the raw x tile (f32, 784-wide) to bf16 and zero-fill the 784 -> 896 K
    # padding in a VMEM scratch.  Pure VPU/VMEM work, hidden under the MXU matmuls;
    # this replaces a whole wrapper-side HBM pad+cast pass over x.
    xp_ref[...] = jnp.zeros_like(xp_ref)
    xp_ref[:, :NUM_INPUT] = x_ref[...].astype(xp_ref.dtype)

    # Layer 1: (tile, 896) @ (896, 512) on the MXU, f32 accumulation; bias+ReLU on VPU.
    h1 = jnp.dot(xp_ref[...], w1_ref[...], preferred_element_type=jnp.float32)
    h1 = jnp.maximum(h1 + b1_ref[...], 0.0)
    # Layer 2: cast the activation to the weight compute dtype (bf16) for the MXU.
    h2 = jnp.dot(h1.astype(w2_ref.dtype), w2_ref[...],
                 preferred_element_type=jnp.float32)
    h2 = jnp.maximum(h2 + b2_ref[...], 0.0)
    # Layer 3: output lane-padded to 128 columns -> full-width (unmasked) stores.
    out = jnp.dot(h2.astype(w3_ref.dtype), w3_ref[...],
                  preferred_element_type=jnp.float32)
    o_ref[...] = (out + b3_ref[...]).astype(o_ref.dtype)


def prepare_params(params, *, compute_dtype=jnp.bfloat16):
    """One-time weight prep: zero-pad (in, out)-layout weights/biases to lane-aligned
    shapes and cast weights to the MXU compute dtype.  Call once, reuse the result
    across every forward call (keeps the per-call path free of weight HBM traffic)."""
    def pad_w(w, rows, cols):
        r, c = w.shape
        return jnp.pad(w, ((0, rows - r), (0, cols - c))).astype(compute_dtype)

    def pad_b(b, cols):
        return jnp.pad(b, (0, cols - b.shape[0])).reshape(1, cols).astype(jnp.float32)

    return dict(
        w1=pad_w(params["w1"], D_IN_P, H1_P), b1=pad_b(params["b1"], H1_P),
        w2=pad_w(params["w2"], H1_P, H2_P),   b2=pad_b(params["b2"], H2_P),
        w3=pad_w(params["w3"], H2_P, D_OUT_P), b3=pad_b(params["b3"], D_OUT_P),
    )


def dnn_model_forward(x, params, *, batch_tile=None, out_dtype=jnp.float32):
    """Fused forward pass of DNN_Model as a single Pallas kernel.

    x: (B, 784) float32 (or bfloat16)
    params: preferably the output of prepare_params() (padded + bf16).  Raw
            (in, out)-layout f32 params are also accepted (padded on the fly).
    Returns (B, 10) float32.
    """
    B, D_in = x.shape
    assert D_in == NUM_INPUT

    pp = params
    if pp["w1"].shape != (D_IN_P, H1_P):
        # Raw params were passed; pad/cast on the fly.  Prefer calling
        # prepare_params() once up front and reusing it across forwards.
        pp = prepare_params(pp)
    compute_dtype = pp["w1"].dtype

    # Batch tiling:
    #   * very large B: 512-row tiles amortize the ~0.35us/step grid overhead and
    #     keep the MXU M dimension full (v5e/v6e).
    #   * 256 <= B < 2048: 128-row tiles guarantee >= 2 grid steps so the
    #     ("parallel",) grid axis can shard across both v7x TensorCores.
    #   * small B: one tile covering the whole batch, rounded to 16 rows so the
    #     bf16 activation tiles are fully sublane-packed.
    if batch_tile is None:
        if B >= 2048:
            batch_tile = 512
        elif B >= 256:
            batch_tile = 128
        else:
            batch_tile = B
    batch_tile = max(16, _round_up(batch_tile, 16))

    # Only pad the batch when it is smaller than a single tile; otherwise Pallas
    # masks the partial trailing tile (its rows are never written back), so no
    # wrapper-side copy of x is needed.
    if B < batch_tile:
        x = jnp.pad(x, ((0, batch_tile - B), (0, 0)))
    rows = x.shape[0]
    grid = (pl.cdiv(rows, batch_tile),)

    w_item = jnp.dtype(compute_dtype).itemsize
    flops = 2 * rows * (D_IN_P * H1_P + H1_P * H2_P + H2_P * D_OUT_P)
    bytes_accessed = (
        rows * NUM_INPUT * x.dtype.itemsize                             # x (as provided)
        + (D_IN_P * H1_P + H1_P * H2_P + H2_P * D_OUT_P) * w_item       # weights
        + (H1_P + H2_P + D_OUT_P) * 4                                   # biases (f32)
        + rows * D_OUT_P * jnp.dtype(out_dtype).itemsize                # output
    )
    cost = pl.CostEstimate(flops=flops, transcendentals=0,
                           bytes_accessed=bytes_accessed)

    out_p = pl.pallas_call(
        _mlp_kernel,
        out_shape=jax.ShapeDtypeStruct((rows, D_OUT_P), out_dtype),
        grid_spec=pltpu.PrefetchScalarGridSpec(
            num_scalar_prefetch=0,
            grid=grid,
            in_specs=[
                # x tile: feature dim left at 784 (== full array dim -> legal block).
                pl.BlockSpec((batch_tile, NUM_INPUT), lambda i: (i, 0)),
                # Weights / biases: full blocks, constant index_map -> fetched once.
                pl.BlockSpec((D_IN_P, H1_P), lambda i: (0, 0)),   # w1
                pl.BlockSpec((1, H1_P), lambda i: (0, 0)),        # b1
                pl.BlockSpec((H1_P, H2_P), lambda i: (0, 0)),     # w2
                pl.BlockSpec((1, H2_P), lambda i: (0, 0)),        # b2
                pl.BlockSpec((H2_P, D_OUT_P), lambda i: (0, 0)),  # w3
                pl.BlockSpec((1, D_OUT_P), lambda i: (0, 0)),     # b3
            ],
            out_specs=pl.BlockSpec((batch_tile, D_OUT_P), lambda i: (i, 0)),
            # In-kernel staging buffer for the bf16-cast, K-padded x tile.
            scratch_shapes=[pltpu.VMEM((batch_tile, D_IN_P), compute_dtype)],
        ),
        compiler_params=pltpu.CompilerParams(
            dimension_semantics=("parallel",),
            # Comfortable headroom for the 512-row tile on every generation
            # (v5e/v6e 128 MiB, v7x 64 MiB physical VMEM).
            vmem_limit_bytes=32 * 1024 * 1024,
        ),
        cost_estimate=cost,
    )(x, pp["w1"], pp["b1"], pp["w2"], pp["b2"], pp["w3"], pp["b3"])

    # Strip batch padding / partial-tile rows and the lane padding of the 10-wide output.
    return out_p[:B, :NUM_OUTPUT].astype(jnp.float32)


def init_params(key):
    """Deterministic init mimicking nn.Linear's uniform(-1/sqrt(fan_in), +1/sqrt(fan_in))."""
    dims = [NUM_INPUT] + HIDDEN_LAYERS + [NUM_OUTPUT]
    params = {}
    for idx, (fan_in, fan_out) in enumerate(zip(dims[:-1], dims[1:]), start=1):
        key, kw, kb = jax.random.split(key, 3)
        bound = 1.0 / jnp.sqrt(fan_in)
        # Stored as (in, out) -- transposed relative to torch's (out, in).
        params[f"w{idx}"] = jax.random.uniform(
            kw, (fan_in, fan_out), jnp.float32, minval=-bound, maxval=bound)
        params[f"b{idx}"] = jax.random.uniform(
            kb, (fan_out,), jnp.float32, minval=-bound, maxval=bound)
    return params


def reference_forward(x, params, *, compute_dtype=jnp.bfloat16):
    """Pure-JAX reference mirroring the kernel's bf16 operand rounding + f32 accumulation."""
    c = lambda a: a.astype(compute_dtype).astype(jnp.float32)
    h1 = jnp.maximum(c(x) @ c(params["w1"]) + params["b1"], 0.0)
    h2 = jnp.maximum(c(h1) @ c(params["w2"]) + params["b2"], 0.0)
    return c(h2) @ c(params["w3"]) + params["b3"]


if __name__ == "__main__":
    key = jax.random.PRNGKey(0)
    key, kx = jax.random.split(key)

    batch = 8  # small test batch; feature dims (784/400/300/10) are fixed by the module
    x = jax.random.normal(kx, (batch, NUM_INPUT), dtype=jnp.float32)

    params = init_params(key)

    # One-time weight preparation (pad + bf16 cast), reused across every forward call.
    pp = prepare_params(params)
    fwd = jax.jit(lambda xb: dnn_model_forward(xb, pp))

    out = jax.block_until_ready(fwd(x))

    ref = reference_forward(x, params)
    assert out.shape == (batch, NUM_OUTPUT)
    assert jnp.allclose(out, ref, atol=1e-2, rtol=1e-2), (
        f"Pallas output mismatch vs reference: max abs err "
        f"{float(jnp.max(jnp.abs(out - ref)))}")

    print("KERNEL_OK")
</pallas_src>

<mosaic_0001>
module attributes {stable_mosaic.version = 11 : i64} {
  func.func @_mlp_kernel(%arg0: i32, %arg1: memref<16x784xf32, #tpu.memory_space<vmem>>, %arg2: memref<896x512xbf16, #tpu.memory_space<vmem>>, %arg3: memref<1x512xf32, #tpu.memory_space<vmem>>, %arg4: memref<512x384xbf16, #tpu.memory_space<vmem>>, %arg5: memref<1x384xf32, #tpu.memory_space<vmem>>, %arg6: memref<384x128xbf16, #tpu.memory_space<vmem>>, %arg7: memref<1x128xf32, #tpu.memory_space<vmem>>, %arg8: memref<16x128xf32, #tpu.memory_space<vmem>>, %arg9: memref<16x896xbf16, #tpu.memory_space<vmem>>) attributes {dimension_semantics = [#tpu.dimension_semantics<parallel>], iteration_bounds = array<i64: 1>, scalar_prefetch = 0 : i64, scratch_operands = 1 : i64, tpu.core_type = #tpu.core_type<tc>, window_params = [{transform_indices = @transform_0, window_bounds = array<i64: 16, 784>}, {pipeline_mode = #tpu.pipeline_mode<synchronous>, transform_indices = @transform_1, window_bounds = array<i64: 896, 512>}, {pipeline_mode = #tpu.pipeline_mode<synchronous>, transform_indices = @transform_2, window_bounds = array<i64: 1, 512>}, {pipeline_mode = #tpu.pipeline_mode<synchronous>, transform_indices = @transform_3, window_bounds = array<i64: 512, 384>}, {pipeline_mode = #tpu.pipeline_mode<synchronous>, transform_indices = @transform_4, window_bounds = array<i64: 1, 384>}, {pipeline_mode = #tpu.pipeline_mode<synchronous>, transform_indices = @transform_5, window_bounds = array<i64: 384, 128>}, {pipeline_mode = #tpu.pipeline_mode<synchronous>, transform_indices = @transform_6, window_bounds = array<i64: 1, 128>}, {transform_indices = @transform_7, window_bounds = array<i64: 16, 128>}]} {
    %cst = arith.constant 0.000000e+00 : bf16
    %0 = vector.broadcast %cst : bf16 to vector<16x896xbf16>
    %c0 = arith.constant 0 : index
    %c0_0 = arith.constant 0 : index
    %1 = vector.load %arg9[%c0, %c0_0] : memref<16x896xbf16, #tpu.memory_space<vmem>>, vector<16x896xbf16>
    tpu.vector_store %arg9[%c0, %c0_0], %0 {strides = array<i32>} : memref<16x896xbf16, #tpu.memory_space<vmem>>, vector<16x896xbf16>,
    %c0_1 = arith.constant 0 : index
    %c0_2 = arith.constant 0 : index
    %2 = vector.load %arg1[%c0_1, %c0_2] : memref<16x784xf32, #tpu.memory_space<vmem>>, vector<16x784xf32>
    %3 = arith.truncf %2 : vector<16x784xf32> to vector<16x784xbf16>
    %c0_3 = arith.constant 0 : index
    %c0_4 = arith.constant 0 : index
    %4 = vector.load %arg9[%c0_3, %c0_4] : memref<16x896xbf16, #tpu.memory_space<vmem>>, vector<16x784xbf16>
    tpu.vector_store %arg9[%c0_3, %c0_4], %3 {strides = array<i32>} : memref<16x896xbf16, #tpu.memory_space<vmem>>, vector<16x784xbf16>,
    %c0_5 = arith.constant 0 : index
    %c0_6 = arith.constant 0 : index
    %5 = vector.load %arg9[%c0_5, %c0_6] : memref<16x896xbf16, #tpu.memory_space<vmem>>, vector<16x896xbf16>
    %c0_7 = arith.constant 0 : index
    %c0_8 = arith.constant 0 : index
    %6 = vector.load %arg2[%c0_7, %c0_8] : memref<896x512xbf16, #tpu.memory_space<vmem>>, vector<896x512xbf16>
    %cst_9 = arith.constant dense<0.000000e+00> : vector<16x512xf32>
    %7 = tpu.matmul %5, %6, %cst_9 {dimension_numbers = #tpu.dot_dimension_numbers<[1], [0], [0], [1], [0, 0, 1, 1], [], []>} : vector<16x896xbf16>, vector<896x512xbf16>, vector<16x512xf32> -> vector<16x512xf32>
    %c0_10 = arith.constant 0 : index
    %c0_11 = arith.constant 0 : index
    %8 = vector.load %arg3[%c0_10, %c0_11] : memref<1x512xf32, #tpu.memory_space<vmem>>, vector<1x512xf32>
    %9 = vector.broadcast %8 : vector<1x512xf32> to vector<16x512xf32>
    %10 = arith.addf %7, %9 : vector<16x512xf32>
    %cst_12 = arith.constant 0.000000e+00 : f32
    %11 = vector.broadcast %cst_12 : f32 to vector<16x512xf32>
    %12 = arith.maximumf %10, %11 : vector<16x512xf32>
    %13 = arith.truncf %12 : vector<16x512xf32> to vector<16x512xbf16>
    %c0_13 = arith.constant 0 : index
    %c0_14 = arith.constant 0 : index
    %14 = vector.load %arg4[%c0_13, %c0_14] : memref<512x384xbf16, #tpu.memory_space<vmem>>, vector<512x384xbf16>
    %cst_15 = arith.constant dense<0.000000e+00> : vector<16x384xf32>
    %15 = tpu.matmul %13, %14, %cst_15 {dimension_numbers = #tpu.dot_dimension_numbers<[1], [0], [0], [1], [0, 0, 1, 1], [], []>} : vector<16x512xbf16>, vector<512x384xbf16>, vector<16x384xf32> -> vector<16x384xf32>
    %c0_16 = arith.constant 0 : index
    %c0_17 = arith.constant 0 : index
    %16 = vector.load %arg5[%c0_16, %c0_17] : memref<1x384xf32, #tpu.memory_space<vmem>>, vector<1x384xf32>
    %17 = vector.broadcast %16 : vector<1x384xf32> to vector<16x384xf32>
    %18 = arith.addf %15, %17 : vector<16x384xf32>
    %cst_18 = arith.constant 0.000000e+00 : f32
    %19 = vector.broadcast %cst_18 : f32 to vector<16x384xf32>
    %20 = arith.maximumf %18, %19 : vector<16x384xf32>
    %21 = arith.truncf %20 : vector<16x384xf32> to vector<16x384xbf16>
    %c0_19 = arith.constant 0 : index
    %c0_20 = arith.constant 0 : index
    %22 = vector.load %arg6[%c0_19, %c0_20] : memref<384x128xbf16, #tpu.memory_space<vmem>>, vector<384x128xbf16>
    %cst_21 = arith.constant dense<0.000000e+00> : vector<16x128xf32>
    %23 = tpu.matmul %21, %22, %cst_21 {dimension_numbers = #tpu.dot_dimension_numbers<[1], [0], [0], [1], [0, 0, 1, 1], [], []>} : vector<16x384xbf16>, vector<384x128xbf16>, vector<16x128xf32> -> vector<16x128xf32>
    %c0_22 = arith.constant 0 : index
    %c0_23 = arith.constant 0 : index
    %24 = vector.load %arg7[%c0_22, %c0_23] : memref<1x128xf32, #tpu.memory_space<vmem>>, vector<1x128xf32>
    %25 = vector.broadcast %24 : vector<1x128xf32> to vector<16x128xf32>
    %26 = arith.addf %23, %25 : vector<16x128xf32>
    %c0_24 = arith.constant 0 : index
    %c0_25 = arith.constant 0 : index
    %27 = vector.load %arg8[%c0_24, %c0_25] : memref<16x128xf32, #tpu.memory_space<vmem>>, vector<16x128xf32>
    tpu.vector_store %arg8[%c0_24, %c0_25], %26 {strides = array<i32>} : memref<16x128xf32, #tpu.memory_space<vmem>>, vector<16x128xf32>,
    return
  }
  func.func @transform_0(%arg0: i32) -> (i32, i32) {
    %c0_i32 = arith.constant 0 : i32
    %c0_i32_0 = arith.constant 0 : i32
    return %arg0, %c0_i32 : i32, i32
  }
  func.func @transform_1(%arg0: i32) -> (i32, i32) {
    %c0_i32 = arith.constant 0 : i32
    %c0_i32_0 = arith.constant 0 : i32
    %c0_i32_1 = arith.constant 0 : i32
    return %c0_i32, %c0_i32_0 : i32, i32
  }
  func.func @transform_2(%arg0: i32) -> (i32, i32) {
    %c0_i32 = arith.constant 0 : i32
    %c0_i32_0 = arith.constant 0 : i32
    %c0_i32_1 = arith.constant 0 : i32
    return %c0_i32, %c0_i32_0 : i32, i32
  }
  func.func @transform_3(%arg0: i32) -> (i32, i32) {
    %c0_i32 = arith.constant 0 : i32
    %c0_i32_0 = arith.constant 0 : i32
    %c0_i32_1 = arith.constant 0 : i32
    return %c0_i32, %c0_i32_0 : i32, i32
  }
  func.func @transform_4(%arg0: i32) -> (i32, i32) {
    %c0_i32 = arith.constant 0 : i32
    %c0_i32_0 = arith.constant 0 : i32
    %c0_i32_1 = arith.constant 0 : i32
    return %c0_i32, %c0_i32_0 : i32, i32
  }
  func.func @transform_5(%arg0: i32) -> (i32, i32) {
    %c0_i32 = arith.constant 0 : i32
    %c0_i32_0 = arith.constant 0 : i32
    %c0_i32_1 = arith.constant 0 : i32
    return %c0_i32, %c0_i32_0 : i32, i32
  }
  func.func @transform_6(%arg0: i32) -> (i32, i32) {
    %c0_i32 = arith.constant 0 : i32
    %c0_i32_0 = arith.constant 0 : i32
    %c0_i32_1 = arith.constant 0 : i32
    return %c0_i32, %c0_i32_0 : i32, i32
  }
  func.func @transform_7(%arg0: i32) -> (i32, i32) {
    %c0_i32 = arith.constant 0 : i32
    %c0_i32_0 = arith.constant 0 : i32
    return %arg0, %c0_i32 : i32, i32
  }
}

</mosaic_0001>

<llo_original>
// kernel: _lambda_.1
$region0: #{_lambda_.1}
  #allocation0 [shape = 'u32[]', space=smem, size = 0x4, offset = 0x4, fixed_abs, tag = 'smem constant byte address 0x4 - core index']
  #allocation1 [shape = 'u32[144,128]{1,0:T(1,128)}', space=vmem, size = 0x12000, scoped, tag = 'internal scratch']
  #allocation2 [shape = 'bf16[16,896]{1,0:T(16,128)(2,1)}', space=vmem, size = 0x7000, scoped, tag = 'scratch operand']
  %s0 = inlined_call_operand.vmem [shape: f32[16,784], index: 0, kind: input, shape index: {}]
  %s1 = inlined_call_operand.vmem [shape: bf16[896,512], index: 1, kind: input, shape index: {}]
  %s2 = inlined_call_operand.vmem [shape: f32[1,512], index: 2, kind: input, shape index: {}]
  %s3 = inlined_call_operand.vmem [shape: bf16[512,384], index: 3, kind: input, shape index: {}]
  %s4 = inlined_call_operand.vmem [shape: f32[1,384], index: 4, kind: input, shape index: {}]
  %s5 = inlined_call_operand.vmem [shape: bf16[384,128], index: 5, kind: input, shape index: {}]
  %s6 = inlined_call_operand.vmem [shape: f32[1,128], index: 6, kind: input, shape index: {}]
  %s7 = inlined_call_operand.vmem [shape: f32[16,128], index: 7, kind: output, shape index: {}]
  %s8 = sld [smem:[#allocation0]]
  $region38: #{_lambda_.1} parent=0
    _
  %s10 = ssub.s32 1, %s8
  %s11 = scalar_select 0, %s10, %s8
  // Predicated region
  $region2: #{_lambda_.1} parent=0 // pred_check
    _
  $region3: #{_lambda_.1} parent=0 // pred_check_branch
    %13 = sbr.rel (0) target = $region5
  $region4: #{_lambda_.1} parent=0 // pred_region
    _
  $region5: #{_lambda_.1} parent=0 // pred_fallthru
    _
  // Predicated region
  $region6: #{_lambda_.1} parent=0 // pred_check
    _
  $region7: #{_lambda_.1} parent=0 // pred_check_branch
    %15 = sbr.rel (0) target = $region9
  $region8: #{_lambda_.1} parent=0 // pred_region
    _
  $region9: #{_lambda_.1} parent=0 // pred_fallthru
    _
  // Predicated region
  $region10: #{_lambda_.1} parent=0 // pred_check
    _
  $region11: #{_lambda_.1} parent=0 // pred_check_branch
    %17 = sbr.rel (0) target = $region13
  $region12: #{_lambda_.1} parent=0 // pred_region
    _
  $region13: #{_lambda_.1} parent=0 // pred_fallthru
    _
  // Predicated region
  $region14: #{_lambda_.1} parent=0 // pred_check
    _
  $region15: #{_lambda_.1} parent=0 // pred_check_branch
    %19 = sbr.rel (0) target = $region17
  $region16: #{_lambda_.1} parent=0 // pred_region
    _
  $region17: #{_lambda_.1} parent=0 // pred_fallthru
    _
  // Predicated region
  $region18: #{_lambda_.1} parent=0 // pred_check
    _
  $region19: #{_lambda_.1} parent=0 // pred_check_branch
    %21 = sbr.rel (0) target = $region21
  $region20: #{_lambda_.1} parent=0 // pred_region
    _
  $region21: #{_lambda_.1} parent=0 // pred_fallthru
    _
  // Predicated region
  $region22: #{_lambda_.1} parent=0 // pred_check
    _
  $region23: #{_lambda_.1} parent=0 // pred_check_branch
    %23 = sbr.rel (0) target = $region25
  $region24: #{_lambda_.1} parent=0 // pred_region
    _
  $region25: #{_lambda_.1} parent=0 // pred_fallthru
    _
  // Predicated region
  $region26: #{_lambda_.1} parent=0 // pred_check
    _
  $region27: #{_lambda_.1} parent=0 // pred_check_branch
    %25 = sbr.rel (0) target = $region29
  $region28: #{_lambda_.1} parent=0 // pred_region
    _
  $region29: #{_lambda_.1} parent=0 // pred_fallthru
    _
  %27 = vst [vmem:[#allocation2] sm:$0xff] 0
  %28 = vst [vmem:[#allocation2 + $0x8] sm:$0xff] 0
  %29 = vst [vmem:[#allocation2 + $0x10] sm:$0xff] 0
  %30 = vst [vmem:[#allocation2 + $0x18] sm:$0xff] 0
  %31 = vst [vmem:[#allocation2 + $0x20] sm:$0xff] 0
  %32 = vst [vmem:[#allocation2 + $0x28] sm:$0xff] 0
  %33 = vst [vmem:[#allocation2 + $0x30] sm:$0xff] 0
  %v34 = vld [vmem:[%s0] sm:$0xff]
  %v35 = vld [vmem:[%s0 + $0x8] sm:$0xff]
  %v36 = vld [vmem:[%s0 + $0x10] sm:$0xff]
  %v37 = vld [vmem:[%s0 + $0x18] sm:$0xff]
  %v38 = vld [vmem:[%s0 + $0x20] sm:$0xff]
  %v39 = vld [vmem:[%s0 + $0x28] sm:$0xff]
  %v40 = vld [vmem:[%s0 + $0x30] sm:$0xff]
  %v41 = vld [vmem:[%s0 + $0x38] sm:$0xff]
  %v42 = vld [vmem:[%s0 + $0x40] sm:$0xff]
  %v43 = vld [vmem:[%s0 + $0x48] sm:$0xff]
  %v44 = vld [vmem:[%s0 + $0x50] sm:$0xff]
  %v45 = vld [vmem:[%s0 + $0x58] sm:$0xff]
  %v46 = vld [vmem:[%s0 + $0x60] sm:$0xff]
  %v47 = vld [vmem:[%s0 + $0x68] sm:$0xff]
  %v48 = vpack.c.bf16 %v41, %v34
  %v49 = vpack.c.bf16 %v42, %v35
  %v50 = vpack.c.bf16 %v43, %v36
  %v51 = vpack.c.bf16 %v44, %v37
  %v52 = vpack.c.bf16 %v45, %v38
  %v53 = vpack.c.bf16 %v46, %v39
  %v54 = vpack.c.bf16 %v47, %v40
  %55 = vst [vmem:[#allocation2] sm:$0xff] %v48
  %56 = vst [vmem:[#allocation2 + $0x8] sm:$0xff] %v49
  %57 = vst [vmem:[#allocation2 + $0x10] sm:$0xff] %v50
  %58 = vst [vmem:[#allocation2 + $0x18] sm:$0xff] %v51
  %59 = vst [vmem:[#allocation2 + $0x20] sm:$0xff] %v52
  %60 = vst [vmem:[#allocation2 + $0x28] sm:$0xff] %v53
  %vm61 = vcmask 130048
  %62 = vst.msk [vmem:[#allocation2 + $0x30] sm:$0xff] %vm61, %v54
  %v63 = vld [vmem:[#allocation2] sm:$0xff]
  %v64 = vld [vmem:[#allocation2 + $0x8] sm:$0xff]
  %v65 = vld [vmem:[#allocation2 + $0x10] sm:$0xff]
  %v66 = vld [vmem:[#allocation2 + $0x18] sm:$0xff]
  %v67 = vld [vmem:[#allocation2 + $0x20] sm:$0xff]
  %v68 = vld [vmem:[#allocation2 + $0x28] sm:$0xff]
  %v69 = vld [vmem:[#allocation2 + $0x30] sm:$0xff]
  %v70 = vld [vmem:[%s1] sm:$0xff]
  %v71 = vld [vmem:[%s1 + $0x8] sm:$0xff]
  %v72 = vld [vmem:[%s1 + $0x10] sm:$0xff]
  %v73 = vld [vmem:[%s1 + $0x18] sm:$0xff]
  %v74 = vld [vmem:[%s1 + $0x20] sm:$0xff]
  %v75 = vld [vmem:[%s1 + $0x28] sm:$0xff]
  %v76 = vld [vmem:[%s1 + $0x30] sm:$0xff]
  %v77 = vld [vmem:[%s1 + $0x38] sm:$0xff]
  %v78 = vld [vmem:[%s1 + $0x40] sm:$0xff]
  %v79 = vld [vmem:[%s1 + $0x48] sm:$0xff]
  %v80 = vld [vmem:[%s1 + $0x50] sm:$0xff]
  %v81 = vld [vmem:[%s1 + $0x58] sm:$0xff]
  %v82 = vld [vmem:[%s1 + $0x60] sm:$0xff]
  %v83 = vld [vmem:[%s1 + $0x68] sm:$0xff]
  %v84 = vld [vmem:[%s1 + $0x70] sm:$0xff]
  %v85 = vld [vmem:[%s1 + $0x78] sm:$0xff]
  %v86 = vld [vmem:[%s1 + $0x80] sm:$0xff]
  %v87 = vld [vmem:[%s1 + $0x88] sm:$0xff]
  %v88 = vld [vmem:[%s1 + $0x90] sm:$0xff]
  %v89 = vld [vmem:[%s1 + $0x98] sm:$0xff]
  %v90 = vld [vmem:[%s1 + $0xa0] sm:$0xff]
  %v91 = vld [vmem:[%s1 + $0xa8] sm:$0xff]
  %v92 = vld [vmem:[%s1 + $0xb0] sm:$0xff]
  %v93 = vld [vmem:[%s1 + $0xb8] sm:$0xff]
  %v94 = vld [vmem:[%s1 + $0xc0] sm:$0xff]
  %v95 = vld [vmem:[%s1 + $0xc8] sm:$0xff]
  %v96 = vld [vmem:[%s1 + $0xd0] sm:$0xff]
  %v97 = vld [vmem:[%s1 + $0xd8] sm:$0xff]
  %v98 = vld [vmem:[%s1 + $0xe0] sm:$0xff]
  %v99 = vld [vmem:[%s1 + $0xe8] sm:$0xff]
  %v100 = vld [vmem:[%s1 + $0xf0] sm:$0xff]
  %v101 = vld [vmem:[%s1 + $0xf8] sm:$0xff]
  %v102 = vld [vmem:[%s1 + $0x100] sm:$0xff]
  %v103 = vld [vmem:[%s1 + $0x108] sm:$0xff]
  %v104 = vld [vmem:[%s1 + $0x110] sm:$0xff]
  %v105 = vld [vmem:[%s1 + $0x118] sm:$0xff]
  %v106 = vld [vmem:[%s1 + $0x120] sm:$0xff]
  %v107 = vld [vmem:[%s1 + $0x128] sm:$0xff]
  %v108 = vld [vmem:[%s1 + $0x130] sm:$0xff]
  %v109 = vld [vmem:[%s1 + $0x138] sm:$0xff]
  %v110 = vld [vmem:[%s1 + $0x140] sm:$0xff]
  %v111 = vld [vmem:[%s1 + $0x148] sm:$0xff]
  %v112 = vld [vmem:[%s1 + $0x150] sm:$0xff]
  %v113 = vld [vmem:[%s1 + $0x158] sm:$0xff]
  %v114 = vld [vmem:[%s1 + $0x160] sm:$0xff]
  %v115 = vld [vmem:[%s1 + $0x168] sm:$0xff]
  %v116 = vld [vmem:[%s1 + $0x170] sm:$0xff]
  %v117 = vld [vmem:[%s1 + $0x178] sm:$0xff]
  %v118 = vld [vmem:[%s1 + $0x180] sm:$0xff]
  %v119 = vld [vmem:[%s1 + $0x188] sm:$0xff]
  %v120 = vld [vmem:[%s1 + $0x190] sm:$0xff]
  %v121 = vld [vmem:[%s1 + $0x198] sm:$0xff]
  %v122 = vld [vmem:[%s1 + $0x1a0] sm:$0xff]
  %v123 = vld [vmem:[%s1 + $0x1a8] sm:$0xff]
  %v124 = vld [vmem:[%s1 + $0x1b0] sm:$0xff]
  %v125 = vld [vmem:[%s1 + $0x1b8] sm:$0xff]
  %v126 = vld [vmem:[%s1 + $0x1c0] sm:$0xff]
  %v127 = vld [vmem:[%s1 + $0x1c8] sm:$0xff]
  %v128 = vld [vmem:[%s1 + $0x1d0] sm:$0xff]
  %v129 = vld [vmem:[%s1 + $0x1d8] sm:$0xff]
  %v130 = vld [vmem:[%s1 + $0x1e0] sm:$0xff]
  %v131 = vld [vmem:[%s1 + $0x1e8] sm:$0xff]
  %v132 = vld [vmem:[%s1 + $0x1f0] sm:$0xff]
  %v133 = vld [vmem:[%s1 + $0x1f8] sm:$0xff]
  %v134 = vld [vmem:[%s1 + $0x200] sm:$0xff]
  %v135 = vld [vmem:[%s1 + $0x208] sm:$0xff]
  %v136 = vld [vmem:[%s1 + $0x210] sm:$0xff]
  %v137 = vld [vmem:[%s1 + $0x218] sm:$0xff]
  %v138 = vld [vmem:[%s1 + $0x220] sm:$0xff]
  %v139 = vld [vmem:[%s1 + $0x228] sm:$0xff]
  %v140 = vld [vmem:[%s1 + $0x230] sm:$0xff]
  %v141 = vld [vmem:[%s1 + $0x238] sm:$0xff]
  %v142 = vld [vmem:[%s1 + $0x240] sm:$0xff]
  %v143 = vld [vmem:[%s1 + $0x248] sm:$0xff]
  %v144 = vld [vmem:[%s1 + $0x250] sm:$0xff]
  %v145 = vld [vmem:[%s1 + $0x258] sm:$0xff]
  %v146 = vld [vmem:[%s1 + $0x260] sm:$0xff]
  %v147 = vld [vmem:[%s1 + $0x268] sm:$0xff]
  %v148 = vld [vmem:[%s1 + $0x270] sm:$0xff]
  %v149 = vld [vmem:[%s1 + $0x278] sm:$0xff]
  %v150 = vld [vmem:[%s1 + $0x280] sm:$0xff]
  %v151 = vld [vmem:[%s1 + $0x288] sm:$0xff]
  %v152 = vld [vmem:[%s1 + $0x290] sm:$0xff]
  %v153 = vld [vmem:[%s1 + $0x298] sm:$0xff]
  %v154 = vld [vmem:[%s1 + $0x2a0] sm:$0xff]
  %v155 = vld [vmem:[%s1 + $0x2a8] sm:$0xff]
  %v156 = vld [vmem:[%s1 + $0x2b0] sm:$0xff]
  %v157 = vld [vmem:[%s1 + $0x2b8] sm:$0xff]
  %v158 = vld [vmem:[%s1 + $0x2c0] sm:$0xff]
  %v159 = vld [vmem:[%s1 + $0x2c8] sm:$0xff]
  %v160 = vld [vmem:[%s1 + $0x2d0] sm:$0xff]
  %v161 = vld [vmem:[%s1 + $0x2d8] sm:$0xff]
  %v162 = vld [vmem:[%s1 + $0x2e0] sm:$0xff]
  %v163 = vld [vmem:[%s1 + $0x2e8] sm:$0xff]
  %v164 = vld [vmem:[%s1 + $0x2f0] sm:$0xff]
  %v165 = vld [vmem:[%s1 + $0x2f8] sm:$0xff]
  %v166 = vld [vmem:[%s1 + $0x300] sm:$0xff]
  %v167 = vld [vmem:[%s1 + $0x308] sm:$0xff]
  %v168 = vld [vmem:[%s1 + $0x310] sm:$0xff]
  %v169 = vld [vmem:[%s1 + $0x318] sm:$0xff]
  %v170 = vld [vmem:[%s1 + $0x320] sm:$0xff]
  %v171 = vld [vmem:[%s1 + $0x328] sm:$0xff]
  %v172 = vld [vmem:[%s1 + $0x330] sm:$0xff]
  %v173 = vld [vmem:[%s1 + $0x338] sm:$0xff]
  %v174 = vld [vmem:[%s1 + $0x340] sm:$0xff]
  %v175 = vld [vmem:[%s1 + $0x348] sm:$0xff]
  %v176 = vld [vmem:[%s1 + $0x350] sm:$0xff]
  %v177 = vld [vmem:[%s1 + $0x358] sm:$0xff]
  %v178 = vld [vmem:[%s1 + $0x360] sm:$0xff]
  %v179 = vld [vmem:[%s1 + $0x368] sm:$0xff]
  %v180 = vld [vmem:[%s1 + $0x370] sm:$0xff]
  %v181 = vld [vmem:[%s1 + $0x378] sm:$0xff]
  %v182 = vld [vmem:[%s1 + $0x380] sm:$0xff]
  %v183 = vld [vmem:[%s1 + $0x388] sm:$0xff]
  %v184 = vld [vmem:[%s1 + $0x390] sm:$0xff]
  %v185 = vld [vmem:[%s1 + $0x398] sm:$0xff]
  %v186 = vld [vmem:[%s1 + $0x3a0] sm:$0xff]
  %v187 = vld [vmem:[%s1 + $0x3a8] sm:$0xff]
  %v188 = vld [vmem:[%s1 + $0x3b0] sm:$0xff]
  %v189 = vld [vmem:[%s1 + $0x3b8] sm:$0xff]
  %v190 = vld [vmem:[%s1 + $0x3c0] sm:$0xff]
  %v191 = vld [vmem:[%s1 + $0x3c8] sm:$0xff]
  %v192 = vld [vmem:[%s1 + $0x3d0] sm:$0xff]
  %v193 = vld [vmem:[%s1 + $0x3d8] sm:$0xff]
  %v194 = vld [vmem:[%s1 + $0x3e0] sm:$0xff]
  %v195 = vld [vmem:[%s1 + $0x3e8] sm:$0xff]
  %v196 = vld [vmem:[%s1 + $0x3f0] sm:$0xff]
  %v197 = vld [vmem:[%s1 + $0x3f8] sm:$0xff]
  %v198 = vld [vmem:[%s1 + $0x400] sm:$0xff]
  %v199 = vld [vmem:[%s1 + $0x408] sm:$0xff]
  %v200 = vld [vmem:[%s1 + $0x410] sm:$0xff]
  %v201 = vld [vmem:[%s1 + $0x418] sm:$0xff]
  %v202 = vld [vmem:[%s1 + $0x420] sm:$0xff]
  %v203 = vld [vmem:[%s1 + $0x428] sm:$0xff]
  %v204 = vld [vmem:[%s1 + $0x430] sm:$0xff]
  %v205 = vld [vmem:[%s1 + $0x438] sm:$0xff]
  %v206 = vld [vmem:[%s1 + $0x440] sm:$0xff]
  %v207 = vld [vmem:[%s1 + $0x448] sm:$0xff]
  %v208 = vld [vmem:[%s1 + $0x450] sm:$0xff]
  %v209 = vld [vmem:[%s1 + $0x458] sm:$0xff]
  %v210 = vld [vmem:[%s1 + $0x460] sm:$0xff]
  %v211 = vld [vmem:[%s1 + $0x468] sm:$0xff]
  %v212 = vld [vmem:[%s1 + $0x470] sm:$0xff]
  %v213 = vld [vmem:[%s1 + $0x478] sm:$0xff]
  %v214 = vld [vmem:[%s1 + $0x480] sm:$0xff]
  %v215 = vld [vmem:[%s1 + $0x488] sm:$0xff]
  %v216 = vld [vmem:[%s1 + $0x490] sm:$0xff]
  %v217 = vld [vmem:[%s1 + $0x498] sm:$0xff]
  %v218 = vld [vmem:[%s1 + $0x4a0] sm:$0xff]
  %v219 = vld [vmem:[%s1 + $0x4a8] sm:$0xff]
  %v220 = vld [vmem:[%s1 + $0x4b0] sm:$0xff]
  %v221 = vld [vmem:[%s1 + $0x4b8] sm:$0xff]
  %v222 = vld [vmem:[%s1 + $0x4c0] sm:$0xff]
  %v223 = vld [vmem:[%s1 + $0x4c8] sm:$0xff]
  %v224 = vld [vmem:[%s1 + $0x4d0] sm:$0xff]
  %v225 = vld [vmem:[%s1 + $0x4d8] sm:$0xff]
  %v226 = vld [vmem:[%s1 + $0x4e0] sm:$0xff]
  %v227 = vld [vmem:[%s1 + $0x4e8] sm:$0xff]
  %v228 = vld [vmem:[%s1 + $0x4f0] sm:$0xff]
  %v229 = vld [vmem:[%s1 + $0x4f8] sm:$0xff]
  %v230 = vld [vmem:[%s1 + $0x500] sm:$0xff]
  %v231 = vld [vmem:[%s1 + $0x508] sm:$0xff]
  %v232 = vld [vmem:[%s1 + $0x510] sm:$0xff]
  %v233 = vld [vmem:[%s1 + $0x518] sm:$0xff]
  %v234 = vld [vmem:[%s1 + $0x520] sm:$0xff]
  %v235 = vld [vmem:[%s1 + $0x528] sm:$0xff]
  %v236 = vld [vmem:[%s1 + $0x530] sm:$0xff]
  %v237 = vld [vmem:[%s1 + $0x538] sm:$0xff]
  %v238 = vld [vmem:[%s1 + $0x540] sm:$0xff]
  %v239 = vld [vmem:[%s1 + $0x548] sm:$0xff]
  %v240 = vld [vmem:[%s1 + $0x550] sm:$0xff]
  %v241 = vld [vmem:[%s1 + $0x558] sm:$0xff]
  %v242 = vld [vmem:[%s1 + $0x560] sm:$0xff]
  %v243 = vld [vmem:[%s1 + $0x568] sm:$0xff]
  %v244 = vld [vmem:[%s1 + $0x570] sm:$0xff]
  %v245 = vld [vmem:[%s1 + $0x578] sm:$0xff]
  %v246 = vld [vmem:[%s1 + $0x580] sm:$0xff]
  %v247 = vld [vmem:[%s1 + $0x588] sm:$0xff]
  %v248 = vld [vmem:[%s1 + $0x590] sm:$0xff]
  %v249 = vld [vmem:[%s1 + $0x598] sm:$0xff]
  %v250 = vld [vmem:[%s1 + $0x5a0] sm:$0xff]
  %v251 = vld [vmem:[%s1 + $0x5a8] sm:$0xff]
  %v252 = vld [vmem:[%s1 + $0x5b0] sm:$0xff]
  %v253 = vld [vmem:[%s1 + $0x5b8] sm:$0xff]
  %v254 = vld [vmem:[%s1 + $0x5c0] sm:$0xff]
  %v255 = vld [vmem:[%s1 + $0x5c8] sm:$0xff]
  %v256 = vld [vmem:[%s1 + $0x5d0] sm:$0xff]
  %v257 = vld [vmem:[%s1 + $0x5d8] sm:$0xff]
  %v258 = vld [vmem:[%s1 + $0x5e0] sm:$0xff]
  %v259 = vld [vmem:[%s1 + $0x5e8] sm:$0xff]
  %v260 = vld [vmem:[%s1 + $0x5f0] sm:$0xff]
  %v261 = vld [vmem:[%s1 + $0x5f8] sm:$0xff]
  %v262 = vld [vmem:[%s1 + $0x600] sm:$0xff]
  %v263 = vld [vmem:[%s1 + $0x608] sm:$0xff]
  %v264 = vld [vmem:[%s1 + $0x610] sm:$0xff]
  %v265 = vld [vmem:[%s1 + $0x618] sm:$0xff]
  %v266 = vld [vmem:[%s1 + $0x620] sm:$0xff]
  %v267 = vld [vmem:[%s1 + $0x628] sm:$0xff]
  %v268 = vld [vmem:[%s1 + $0x630] sm:$0xff]
  %v269 = vld [vmem:[%s1 + $0x638] sm:$0xff]
  %v270 = vld [vmem:[%s1 + $0x640] sm:$0xff]
  %v271 = vld [vmem:[%s1 + $0x648] sm:$0xff]
  %v272 = vld [vmem:[%s1 + $0x650] sm:$0xff]
  %v273 = vld [vmem:[%s1 + $0x658] sm:$0xff]
  %v274 = vld [vmem:[%s1 + $0x660] sm:$0xff]
  %v275 = vld [vmem:[%s1 + $0x668] sm:$0xff]
  %v276 = vld [vmem:[%s1 + $0x670] sm:$0xff]
  %v277 = vld [vmem:[%s1 + $0x678] sm:$0xff]
  %v278 = vld [vmem:[%s1 + $0x680] sm:$0xff]
  %v279 = vld [vmem:[%s1 + $0x688] sm:$0xff]
  %v280 = vld [vmem:[%s1 + $0x690] sm:$0xff]
  %v281 = vld [vmem:[%s1 + $0x698] sm:$0xff]
  %v282 = vld [vmem:[%s1 + $0x6a0] sm:$0xff]
  %v283 = vld [vmem:[%s1 + $0x6a8] sm:$0xff]
  %v284 = vld [vmem:[%s1 + $0x6b0] sm:$0xff]
  %v285 = vld [vmem:[%s1 + $0x6b8] sm:$0xff]
  %v286 = vld [vmem:[%s1 + $0x6c0] sm:$0xff]
  %v287 = vld [vmem:[%s1 + $0x6c8] sm:$0xff]
  %v288 = vld [vmem:[%s1 + $0x6d0] sm:$0xff]
  %v289 = vld [vmem:[%s1 + $0x6d8] sm:$0xff]
  %v290 = vld [vmem:[%s1 + $0x6e0] sm:$0xff]
  %v291 = vld [vmem:[%s1 + $0x6e8] sm:$0xff]
  %v292 = vld [vmem:[%s1 + $0x6f0] sm:$0xff]
  %v293 = vld [vmem:[%s1 + $0x6f8] sm:$0xff]
  %v294 = vld [vmem:[%s2] sm:$0xf]
  %v296 = vlaneseq
  %v297 = vshrl.u32 %v296, 7
  %v298 = vsub.s32 0, %v297
  %v299 = vrot.slane %v294, %v298
  %v300 = vlaneseq
  %v301 = vshrl.u32 %v300, 7
  %v302 = vsub.s32 1, %v301
  %v303 = vrot.slane %v294, %v302
  %v304 = vlaneseq
  %v305 = vshrl.u32 %v304, 7
  %v306 = vsub.s32 2, %v305
  %v307 = vrot.slane %v294, %v306
  %v308 = vlaneseq
  %v309 = vshrl.u32 %v308, 7
  %v310 = vsub.s32 3, %v309
  %v311 = vrot.slane %v294, %v310
  %v540 = vunpack.c.l.b16 %v70
  %v541 = vunpack.c.h.b16 %v70
  %v542 = vunpack.c.l.b16 %v71
  %v543 = vunpack.c.h.b16 %v71
  %v544 = vunpack.c.l.b16 %v72
  %v545 = vunpack.c.h.b16 %v72
  %v546 = vunpack.c.l.b16 %v73
  %v547 = vunpack.c.h.b16 %v73
  %v548 = vunpack.c.l.b16 %v74
  %v549 = vunpack.c.h.b16 %v74
  %v550 = vunpack.c.l.b16 %v75
  %v551 = vunpack.c.h.b16 %v75
  %v552 = vunpack.c.l.b16 %v76
  %v553 = vunpack.c.h.b16 %v76
  %v554 = vunpack.c.l.b16 %v77
  %v555 = vunpack.c.h.b16 %v77
  %v556 = vunpack.c.l.b16 %v78
  %v557 = vunpack.c.h.b16 %v78
  %v558 = vunpack.c.l.b16 %v79
  %v559 = vunpack.c.h.b16 %v79
  %v560 = vunpack.c.l.b16 %v80
  %v561 = vunpack.c.h.b16 %v80
  %v562 = vunpack.c.l.b16 %v81
  %v563 = vunpack.c.h.b16 %v81
  %v564 = vunpack.c.l.b16 %v82
  %v565 = vunpack.c.h.b16 %v82
  %v566 = vunpack.c.l.b16 %v83
  %v567 = vunpack.c.h.b16 %v83
  %v568 = vunpack.c.l.b16 %v84
  %v569 = vunpack.c.h.b16 %v84
  %v570 = vunpack.c.l.b16 %v85
  %v571 = vunpack.c.h.b16 %v85
  %v572 = vunpack.c.l.b16 %v86
  %v573 = vunpack.c.h.b16 %v86
  %v574 = vunpack.c.l.b16 %v87
  %v575 = vunpack.c.h.b16 %v87
  %v576 = vunpack.c.l.b16 %v88
  %v577 = vunpack.c.h.b16 %v88
  %v578 = vunpack.c.l.b16 %v89
  %v579 = vunpack.c.h.b16 %v89
  %v580 = vunpack.c.l.b16 %v90
  %v581 = vunpack.c.h.b16 %v90
  %v582 = vunpack.c.l.b16 %v91
  %v583 = vunpack.c.h.b16 %v91
  %v584 = vunpack.c.l.b16 %v92
  %v585 = vunpack.c.h.b16 %v92
  %v586 = vunpack.c.l.b16 %v93
  %v587 = vunpack.c.h.b16 %v93
  %v588 = vunpack.c.l.b16 %v94
  %v589 = vunpack.c.h.b16 %v94
  %v590 = vunpack.c.l.b16 %v95
  %v591 = vunpack.c.h.b16 %v95
  %v592 = vunpack.c.l.b16 %v96
  %v593 = vunpack.c.h.b16 %v96
  %v594 = vunpack.c.l.b16 %v97
  %v595 = vunpack.c.h.b16 %v97
  %v596 = vunpack.c.l.b16 %v98
  %v597 = vunpack.c.h.b16 %v98
  %v598 = vunpack.c.l.b16 %v99
  %v599 = vunpack.c.h.b16 %v99
  %v600 = vunpack.c.l.b16 %v100
  %v601 = vunpack.c.h.b16 %v100
  %v602 = vunpack.c.l.b16 %v101
  %v603 = vunpack.c.h.b16 %v101
  %v604 = vunpack.c.l.b16 %v102
  %v605 = vunpack.c.h.b16 %v102
  %v606 = vunpack.c.l.b16 %v103
  %v607 = vunpack.c.h.b16 %v103
  %v608 = vunpack.c.l.b16 %v104
  %v609 = vunpack.c.h.b16 %v104
  %v610 = vunpack.c.l.b16 %v105
  %v611 = vunpack.c.h.b16 %v105
  %v612 = vunpack.c.l.b16 %v106
  %v613 = vunpack.c.h.b16 %v106
  %v614 = vunpack.c.l.b16 %v107
  %v615 = vunpack.c.h.b16 %v107
  %v616 = vunpack.c.l.b16 %v108
  %v617 = vunpack.c.h.b16 %v108
  %v618 = vunpack.c.l.b16 %v109
  %v619 = vunpack.c.h.b16 %v109
  %v620 = vunpack.c.l.b16 %v110
  %v621 = vunpack.c.h.b16 %v110
  %v622 = vunpack.c.l.b16 %v111
  %v623 = vunpack.c.h.b16 %v111
  %v624 = vunpack.c.l.b16 %v112
  %v625 = vunpack.c.h.b16 %v112
  %v626 = vunpack.c.l.b16 %v113
  %v627 = vunpack.c.h.b16 %v113
  %v628 = vunpack.c.l.b16 %v114
  %v629 = vunpack.c.h.b16 %v114
  %v630 = vunpack.c.l.b16 %v115
  %v631 = vunpack.c.h.b16 %v115
  %v632 = vunpack.c.l.b16 %v116
  %v633 = vunpack.c.h.b16 %v116
  %v634 = vunpack.c.l.b16 %v117
  %v635 = vunpack.c.h.b16 %v117
  %v636 = vunpack.c.l.b16 %v118
  %v637 = vunpack.c.h.b16 %v118
  %v638 = vunpack.c.l.b16 %v119
  %v639 = vunpack.c.h.b16 %v119
  %v640 = vunpack.c.l.b16 %v120
  %v641 = vunpack.c.h.b16 %v120
  %v642 = vunpack.c.l.b16 %v121
  %v643 = vunpack.c.h.b16 %v121
  %v644 = vunpack.c.l.b16 %v122
  %v645 = vunpack.c.h.b16 %v122
  %v646 = vunpack.c.l.b16 %v123
  %v647 = vunpack.c.h.b16 %v123
  %v648 = vunpack.c.l.b16 %v124
  %v649 = vunpack.c.h.b16 %v124
  %v650 = vunpack.c.l.b16 %v125
  %v651 = vunpack.c.h.b16 %v125
  %v652 = vunpack.c.l.b16 %v126
  %v653 = vunpack.c.h.b16 %v126
  %v654 = vunpack.c.l.b16 %v127
  %v655 = vunpack.c.h.b16 %v127
  %v656 = vunpack.c.l.b16 %v128
  %v657 = vunpack.c.h.b16 %v128
  %v658 = vunpack.c.l.b16 %v129
  %v659 = vunpack.c.h.b16 %v129
  %v660 = vunpack.c.l.b16 %v130
  %v661 = vunpack.c.h.b16 %v130
  %v662 = vunpack.c.l.b16 %v131
  %v663 = vunpack.c.h.b16 %v131
  %v664 = vunpack.c.l.b16 %v132
  %v665 = vunpack.c.h.b16 %v132
  %v666 = vunpack.c.l.b16 %v133
  %v667 = vunpack.c.h.b16 %v133
  %v668 = vunpack.c.l.b16 %v134
  %v669 = vunpack.c.h.b16 %v134
  %v670 = vunpack.c.l.b16 %v135
  %v671 = vunpack.c.h.b16 %v135
  %v672 = vunpack.c.l.b16 %v136
  %v673 = vunpack.c.h.b16 %v136
  %v674 = vunpack.c.l.b16 %v137
  %v675 = vunpack.c.h.b16 %v137
  %v676 = vunpack.c.l.b16 %v138
  %v677 = vunpack.c.h.b16 %v138
  %v678 = vunpack.c.l.b16 %v139
  %v679 = vunpack.c.h.b16 %v139
  %v680 = vunpack.c.l.b16 %v140
  %v681 = vunpack.c.h.b16 %v140
  %v682 = vunpack.c.l.b16 %v141
  %v683 = vunpack.c.h.b16 %v141
  %v684 = vunpack.c.l.b16 %v142
  %v685 = vunpack.c.h.b16 %v142
  %v686 = vunpack.c.l.b16 %v143
  %v687 = vunpack.c.h.b16 %v143
  %v688 = vunpack.c.l.b16 %v144
  %v689 = vunpack.c.h.b16 %v144
  %v690 = vunpack.c.l.b16 %v145
  %v691 = vunpack.c.h.b16 %v145
  %v692 = vunpack.c.l.b16 %v146
  %v693 = vunpack.c.h.b16 %v146
  %v694 = vunpack.c.l.b16 %v147
  %v695 = vunpack.c.h.b16 %v147
  %v696 = vunpack.c.l.b16 %v148
  %v697 = vunpack.c.h.b16 %v148
  %v698 = vunpack.c.l.b16 %v149
  %v699 = vunpack.c.h.b16 %v149
  %v700 = vunpack.c.l.b16 %v150
  %v701 = vunpack.c.h.b16 %v150
  %v702 = vunpack.c.l.b16 %v151
  %v703 = vunpack.c.h.b16 %v151
  %v704 = vunpack.c.l.b16 %v152
  %v705 = vunpack.c.h.b16 %v152
  %v706 = vunpack.c.l.b16 %v153
  %v707 = vunpack.c.h.b16 %v153
  %v708 = vunpack.c.l.b16 %v154
  %v709 = vunpack.c.h.b16 %v154
  %v710 = vunpack.c.l.b16 %v155
  %v711 = vunpack.c.h.b16 %v155
  %v712 = vunpack.c.l.b16 %v156
  %v713 = vunpack.c.h.b16 %v156
  %v714 = vunpack.c.l.b16 %v157
  %v715 = vunpack.c.h.b16 %v157
  %v716 = vunpack.c.l.b16 %v158
  %v717 = vunpack.c.h.b16 %v158
  %v718 = vunpack.c.l.b16 %v159
  %v719 = vunpack.c.h.b16 %v159
  %v720 = vunpack.c.l.b16 %v160
  %v721 = vunpack.c.h.b16 %v160
  %v722 = vunpack.c.l.b16 %v161
  %v723 = vunpack.c.h.b16 %v161
  %v724 = vunpack.c.l.b16 %v162
  %v725 = vunpack.c.h.b16 %v162
  %v726 = vunpack.c.l.b16 %v163
  %v727 = vunpack.c.h.b16 %v163
  %v728 = vunpack.c.l.b16 %v164
  %v729 = vunpack.c.h.b16 %v164
  %v730 = vunpack.c.l.b16 %v165
  %v731 = vunpack.c.h.b16 %v165
  %v732 = vunpack.c.l.b16 %v166
  %v733 = vunpack.c.h.b16 %v166
  %v734 = vunpack.c.l.b16 %v167
  %v735 = vunpack.c.h.b16 %v167
  %v736 = vunpack.c.l.b16 %v168
  %v737 = vunpack.c.h.b16 %v168
  %v738 = vunpack.c.l.b16 %v169
  %v739 = vunpack.c.h.b16 %v169
  %v740 = vunpack.c.l.b16 %v170
  %v741 = vunpack.c.h.b16 %v170
  %v742 = vunpack.c.l.b16 %v171
  %v743 = vunpack.c.h.b16 %v171
  %v744 = vunpack.c.l.b16 %v172
  %v745 = vunpack.c.h.b16 %v172
  %v746 = vunpack.c.l.b16 %v173
  %v747 = vunpack.c.h.b16 %v173
  %v748 = vunpack.c.l.b16 %v174
  %v749 = vunpack.c.h.b16 %v174
  %v750 = vunpack.c.l.b16 %v175
  %v751 = vunpack.c.h.b16 %v175
  %v752 = vunpack.c.l.b16 %v176
  %v753 = vunpack.c.h.b16 %v176
  %v754 = vunpack.c.l.b16 %v177
  %v755 = vunpack.c.h.b16 %v177
  %v756 = vunpack.c.l.b16 %v178
  %v757 = vunpack.c.h.b16 %v178
  %v758 = vunpack.c.l.b16 %v179
  %v759 = vunpack.c.h.b16 %v179
  %v760 = vunpack.c.l.b16 %v180
  %v761 = vunpack.c.h.b16 %v180
  %v762 = vunpack.c.l.b16 %v181
  %v763 = vunpack.c.h.b16 %v181
  %v764 = vunpack.c.l.b16 %v182
  %v765 = vunpack.c.h.b16 %v182
  %v766 = vunpack.c.l.b16 %v183
  %v767 = vunpack.c.h.b16 %v183
  %v768 = vunpack.c.l.b16 %v184
  %v769 = vunpack.c.h.b16 %v184
  %v770 = vunpack.c.l.b16 %v185
  %v771 = vunpack.c.h.b16 %v185
  %v772 = vunpack.c.l.b16 %v186
  %v773 = vunpack.c.h.b16 %v186
  %v774 = vunpack.c.l.b16 %v187
  %v775 = vunpack.c.h.b16 %v187
  %v776 = vunpack.c.l.b16 %v188
  %v777 = vunpack.c.h.b16 %v188
  %v778 = vunpack.c.l.b16 %v189
  %v779 = vunpack.c.h.b16 %v189
  %v780 = vunpack.c.l.b16 %v190
  %v781 = vunpack.c.h.b16 %v190
  %v782 = vunpack.c.l.b16 %v191
  %v783 = vunpack.c.h.b16 %v191
  %v784 = vunpack.c.l.b16 %v192
  %v785 = vunpack.c.h.b16 %v192
  %v786 = vunpack.c.l.b16 %v193
  %v787 = vunpack.c.h.b16 %v193
  %v788 = vunpack.c.l.b16 %v194
  %v789 = vunpack.c.h.b16 %v194
  %v790 = vunpack.c.l.b16 %v195
  %v791 = vunpack.c.h.b16 %v195
  %v792 = vunpack.c.l.b16 %v196
  %v793 = vunpack.c.h.b16 %v196
  %v794 = vunpack.c.l.b16 %v197
  %v795 = vunpack.c.h.b16 %v197
  %v796 = vunpack.c.l.b16 %v198
  %v797 = vunpack.c.h.b16 %v198
  %v798 = vunpack.c.l.b16 %v199
  %v799 = vunpack.c.h.b16 %v199
  %v800 = vunpack.c.l.b16 %v200
  %v801 = vunpack.c.h.b16 %v200
  %v802 = vunpack.c.l.b16 %v201
  %v803 = vunpack.c.h.b16 %v201
  %v804 = vunpack.c.l.b16 %v202
  %v805 = vunpack.c.h.b16 %v202
  %v806 = vunpack.c.l.b16 %v203
  %v807 = vunpack.c.h.b16 %v203
  %v808 = vunpack.c.l.b16 %v204
  %v809 = vunpack.c.h.b16 %v204
  %v810 = vunpack.c.l.b16 %v205
  %v811 = vunpack.c.h.b16 %v205
  %v812 = vunpack.c.l.b16 %v206
  %v813 = vunpack.c.h.b16 %v206
  %v814 = vunpack.c.l.b16 %v207
  %v815 = vunpack.c.h.b16 %v207
  %v816 = vunpack.c.l.b16 %v208
  %v817 = vunpack.c.h.b16 %v208
  %v818 = vunpack.c.l.b16 %v209
  %v819 = vunpack.c.h.b16 %v209
  %v820 = vunpack.c.l.b16 %v210
  %v821 = vunpack.c.h.b16 %v210
  %v822 = vunpack.c.l.b16 %v211
  %v823 = vunpack.c.h.b16 %v211
  %v824 = vunpack.c.l.b16 %v212
  %v825 = vunpack.c.h.b16 %v212
  %v826 = vunpack.c.l.b16 %v213
  %v827 = vunpack.c.h.b16 %v213
  %v828 = vunpack.c.l.b16 %v214
  %v829 = vunpack.c.h.b16 %v214
  %v830 = vunpack.c.l.b16 %v215
  %v831 = vunpack.c.h.b16 %v215
  %v832 = vunpack.c.l.b16 %v216
  %v833 = vunpack.c.h.b16 %v216
  %v834 = vunpack.c.l.b16 %v217
  %v835 = vunpack.c.h.b16 %v217
  %v836 = vunpack.c.l.b16 %v218
  %v837 = vunpack.c.h.b16 %v218
  %v838 = vunpack.c.l.b16 %v219
  %v839 = vunpack.c.h.b16 %v219
  %v840 = vunpack.c.l.b16 %v220
  %v841 = vunpack.c.h.b16 %v220
  %v842 = vunpack.c.l.b16 %v221
  %v843 = vunpack.c.h.b16 %v221
  %v844 = vunpack.c.l.b16 %v222
  %v845 = vunpack.c.h.b16 %v222
  %v846 = vunpack.c.l.b16 %v223
  %v847 = vunpack.c.h.b16 %v223
  %v848 = vunpack.c.l.b16 %v224
  %v849 = vunpack.c.h.b16 %v224
  %v850 = vunpack.c.l.b16 %v225
  %v851 = vunpack.c.h.b16 %v225
  %v852 = vunpack.c.l.b16 %v226
  %v853 = vunpack.c.h.b16 %v226
  %v854 = vunpack.c.l.b16 %v227
  %v855 = vunpack.c.h.b16 %v227
  %v856 = vunpack.c.l.b16 %v228
  %v857 = vunpack.c.h.b16 %v228
  %v858 = vunpack.c.l.b16 %v229
  %v859 = vunpack.c.h.b16 %v229
  %v860 = vunpack.c.l.b16 %v230
  %v861 = vunpack.c.h.b16 %v230
  %v862 = vunpack.c.l.b16 %v231
  %v863 = vunpack.c.h.b16 %v231
  %v864 = vunpack.c.l.b16 %v232
  %v865 = vunpack.c.h.b16 %v232
  %v866 = vunpack.c.l.b16 %v233
  %v867 = vunpack.c.h.b16 %v233
  %v868 = vunpack.c.l.b16 %v234
  %v869 = vunpack.c.h.b16 %v234
  %v870 = vunpack.c.l.b16 %v235
  %v871 = vunpack.c.h.b16 %v235
  %v872 = vunpack.c.l.b16 %v236
  %v873 = vunpack.c.h.b16 %v236
  %v874 = vunpack.c.l.b16 %v237
  %v875 = vunpack.c.h.b16 %v237
  %v876 = vunpack.c.l.b16 %v238
  %v877 = vunpack.c.h.b16 %v238
  %v878 = vunpack.c.l.b16 %v239
  %v879 = vunpack.c.h.b16 %v239
  %v880 = vunpack.c.l.b16 %v240
  %v881 = vunpack.c.h.b16 %v240
  %v882 = vunpack.c.l.b16 %v241
  %v883 = vunpack.c.h.b16 %v241
  %v884 = vunpack.c.l.b16 %v242
  %v885 = vunpack.c.h.b16 %v242
  %v886 = vunpack.c.l.b16 %v243
  %v887 = vunpack.c.h.b16 %v243
  %v888 = vunpack.c.l.b16 %v244
  %v889 = vunpack.c.h.b16 %v244
  %v890 = vunpack.c.l.b16 %v245
  %v891 = vunpack.c.h.b16 %v245
  %v892 = vunpack.c.l.b16 %v246
  %v893 = vunpack.c.h.b16 %v246
  %v894 = vunpack.c.l.b16 %v247
  %v895 = vunpack.c.h.b16 %v247
  %v896 = vunpack.c.l.b16 %v248
  %v897 = vunpack.c.h.b16 %v248
  %v898 = vunpack.c.l.b16 %v249
  %v899 = vunpack.c.h.b16 %v249
  %v900 = vunpack.c.l.b16 %v250
  %v901 = vunpack.c.h.b16 %v250
  %v902 = vunpack.c.l.b16 %v251
  %v903 = vunpack.c.h.b16 %v251
  %v904 = vunpack.c.l.b16 %v252
  %v905 = vunpack.c.h.b16 %v252
  %v906 = vunpack.c.l.b16 %v253
  %v907 = vunpack.c.h.b16 %v253
  %v908 = vunpack.c.l.b16 %v254
  %v909 = vunpack.c.h.b16 %v254
  %v910 = vunpack.c.l.b16 %v255
  %v911 = vunpack.c.h.b16 %v255
  %v912 = vunpack.c.l.b16 %v256
  %v913 = vunpack.c.h.b16 %v256
  %v914 = vunpack.c.l.b16 %v257
  %v915 = vunpack.c.h.b16 %v257
  %v916 = vunpack.c.l.b16 %v258
  %v917 = vunpack.c.h.b16 %v258
  %v918 = vunpack.c.l.b16 %v259
  %v919 = vunpack.c.h.b16 %v259
  %v920 = vunpack.c.l.b16 %v260
  %v921 = vunpack.c.h.b16 %v260
  %v922 = vunpack.c.l.b16 %v261
  %v923 = vunpack.c.h.b16 %v261
  %v924 = vunpack.c.l.b16 %v262
  %v925 = vunpack.c.h.b16 %v262
  %v926 = vunpack.c.l.b16 %v263
  %v927 = vunpack.c.h.b16 %v263
  %v928 = vunpack.c.l.b16 %v264
  %v929 = vunpack.c.h.b16 %v264
  %v930 = vunpack.c.l.b16 %v265
  %v931 = vunpack.c.h.b16 %v265
  %v932 = vunpack.c.l.b16 %v266
  %v933 = vunpack.c.h.b16 %v266
  %v934 = vunpack.c.l.b16 %v267
  %v935 = vunpack.c.h.b16 %v267
  %v936 = vunpack.c.l.b16 %v268
  %v937 = vunpack.c.h.b16 %v268
  %v938 = vunpack.c.l.b16 %v269
  %v939 = vunpack.c.h.b16 %v269
  %v940 = vunpack.c.l.b16 %v270
  %v941 = vunpack.c.h.b16 %v270
  %v942 = vunpack.c.l.b16 %v271
  %v943 = vunpack.c.h.b16 %v271
  %v944 = vunpack.c.l.b16 %v272
  %v945 = vunpack.c.h.b16 %v272
  %v946 = vunpack.c.l.b16 %v273
  %v947 = vunpack.c.h.b16 %v273
  %v948 = vunpack.c.l.b16 %v274
  %v949 = vunpack.c.h.b16 %v274
  %v950 = vunpack.c.l.b16 %v275
  %v951 = vunpack.c.h.b16 %v275
  %v952 = vunpack.c.l.b16 %v276
  %v953 = vunpack.c.h.b16 %v276
  %v954 = vunpack.c.l.b16 %v277
  %v955 = vunpack.c.h.b16 %v277
  %v956 = vunpack.c.l.b16 %v278
  %v957 = vunpack.c.h.b16 %v278
  %v958 = vunpack.c.l.b16 %v279
  %v959 = vunpack.c.h.b16 %v279
  %v960 = vunpack.c.l.b16 %v280
  %v961 = vunpack.c.h.b16 %v280
  %v962 = vunpack.c.l.b16 %v281
  %v963 = vunpack.c.h.b16 %v281
  %v964 = vunpack.c.l.b16 %v282
  %v965 = vunpack.c.h.b16 %v282
  %v966 = vunpack.c.l.b16 %v283
  %v967 = vunpack.c.h.b16 %v283
  %v968 = vunpack.c.l.b16 %v284
  %v969 = vunpack.c.h.b16 %v284
  %v970 = vunpack.c.l.b16 %v285
  %v971 = vunpack.c.h.b16 %v285
  %v972 = vunpack.c.l.b16 %v286
  %v973 = vunpack.c.h.b16 %v286
  %v974 = vunpack.c.l.b16 %v287
  %v975 = vunpack.c.h.b16 %v287
  %v976 = vunpack.c.l.b16 %v288
  %v977 = vunpack.c.h.b16 %v288
  %v978 = vunpack.c.l.b16 %v289
  %v979 = vunpack.c.h.b16 %v289
  %v980 = vunpack.c.l.b16 %v290
  %v981 = vunpack.c.h.b16 %v290
  %v982 = vunpack.c.l.b16 %v291
  %v983 = vunpack.c.h.b16 %v291
  %v984 = vunpack.c.l.b16 %v292
  %v985 = vunpack.c.h.b16 %v292
  %v986 = vunpack.c.l.b16 %v293
  %v987 = vunpack.c.h.b16 %v293
  %v988 = vpack.c.b16 %v544, %v540
  %v989 = vpack.c.b16 %v545, %v541
  %v990 = vpack.c.b16 %v546, %v542
  %v991 = vpack.c.b16 %v547, %v543
  %v992 = vpack.c.b16 %v552, %v548
  %v993 = vpack.c.b16 %v553, %v549
  %v994 = vpack.c.b16 %v554, %v550
  %v995 = vpack.c.b16 %v555, %v551
  %v996 = vpack.c.b16 %v560, %v556
  %v997 = vpack.c.b16 %v561, %v557
  %v998 = vpack.c.b16 %v562, %v558
  %v999 = vpack.c.b16 %v563, %v559
  %v1000 = vpack.c.b16 %v568, %v564
  %v1001 = vpack.c.b16 %v569, %v565
  %v1002 = vpack.c.b16 %v570, %v566
  %v1003 = vpack.c.b16 %v571, %v567
  %v1004 = vpack.c.b16 %v576, %v572
  %v1005 = vpack.c.b16 %v577, %v573
  %v1006 = vpack.c.b16 %v578, %v574
  %v1007 = vpack.c.b16 %v579, %v575
  %v1008 = vpack.c.b16 %v584, %v580
  %v1009 = vpack.c.b16 %v585, %v581
  %v1010 = vpack.c.b16 %v586, %v582
  %v1011 = vpack.c.b16 %v587, %v583
  %v1012 = vpack.c.b16 %v592, %v588
  %v1013 = vpack.c.b16 %v593, %v589
  %v1014 = vpack.c.b16 %v594, %v590
  %v1015 = vpack.c.b16 %v595, %v591
  %v1016 = vpack.c.b16 %v600, %v596
  %v1017 = vpack.c.b16 %v601, %v597
  %v1018 = vpack.c.b16 %v602, %v598
  %v1019 = vpack.c.b16 %v603, %v599
  %v1020 = vpack.c.b16 %v608, %v604
  %v1021 = vpack.c.b16 %v609, %v605
  %v1022 = vpack.c.b16 %v610, %v606
  %v1023 = vpack.c.b16 %v611, %v607
  %v1024 = vpack.c.b16 %v616, %v612
  %v1025 = vpack.c.b16 %v617, %v613
  %v1026 = vpack.c.b16 %v618, %v614
  %v1027 = vpack.c.b16 %v619, %v615
  %v1028 = vpack.c.b16 %v624, %v620
  %v1029 = vpack.c.b16 %v625, %v621
  %v1030 = vpack.c.b16 %v626, %v622
  %v1031 = vpack.c.b16 %v627, %v623
  %v1032 = vpack.c.b16 %v632, %v628
  %v1033 = vpack.c.b16 %v633, %v629
  %v1034 = vpack.c.b16 %v634, %v630
  %v1035 = vpack.c.b16 %v635, %v631
  %v1036 = vpack.c.b16 %v640, %v636
  %v1037 = vpack.c.b16 %v641, %v637
  %v1038 = vpack.c.b16 %v642, %v638
  %v1039 = vpack.c.b16 %v643, %v639
  %v1040 = vpack.c.b16 %v648, %v644
  %v1041 = vpack.c.b16 %v649, %v645
  %v1042 = vpack.c.b16 %v650, %v646
  %v1043 = vpack.c.b16 %v651, %v647
  %v1044 = vpack.c.b16 %v656, %v652
  %v1045 = vpack.c.b16 %v657, %v653
  %v1046 = vpack.c.b16 %v658, %v654
  %v1047 = vpack.c.b16 %v659, %v655
  %v1048 = vpack.c.b16 %v664, %v660
  %v1049 = vpack.c.b16 %v665, %v661
  %v1050 = vpack.c.b16 %v666, %v662
  %v1051 = vpack.c.b16 %v667, %v663
  %v1052 = vpack.c.b16 %v672, %v668
  %v1053 = vpack.c.b16 %v673, %v669
  %v1054 = vpack.c.b16 %v674, %v670
  %v1055 = vpack.c.b16 %v675, %v671
  %v1056 = vpack.c.b16 %v680, %v676
  %v1057 = vpack.c.b16 %v681, %v677
  %v1058 = vpack.c.b16 %v682, %v678
  %v1059 = vpack.c.b16 %v683, %v679
  %v1060 = vpack.c.b16 %v688, %v684
  %v1061 = vpack.c.b16 %v689, %v685
  %v1062 = vpack.c.b16 %v690, %v686
  %v1063 = vpack.c.b16 %v691, %v687
  %v1064 = vpack.c.b16 %v696, %v692
  %v1065 = vpack.c.b16 %v697, %v693
  %v1066 = vpack.c.b16 %v698, %v694
  %v1067 = vpack.c.b16 %v699, %v695
  %v1068 = vpack.c.b16 %v704, %v700
  %v1069 = vpack.c.b16 %v705, %v701
  %v1070 = vpack.c.b16 %v706, %v702
  %v1071 = vpack.c.b16 %v707, %v703
  %v1072 = vpack.c.b16 %v712, %v708
  %v1073 = vpack.c.b16 %v713, %v709
  %v1074 = vpack.c.b16 %v714, %v710
  %v1075 = vpack.c.b16 %v715, %v711
  %v1076 = vpack.c.b16 %v720, %v716
  %v1077 = vpack.c.b16 %v721, %v717
  %v1078 = vpack.c.b16 %v722, %v718
  %v1079 = vpack.c.b16 %v723, %v719
  %v1080 = vpack.c.b16 %v728, %v724
  %v1081 = vpack.c.b16 %v729, %v725
  %v1082 = vpack.c.b16 %v730, %v726
  %v1083 = vpack.c.b16 %v731, %v727
  %v1084 = vpack.c.b16 %v736, %v732
  %v1085 = vpack.c.b16 %v737, %v733
  %v1086 = vpack.c.b16 %v738, %v734
  %v1087 = vpack.c.b16 %v739, %v735
  %v1088 = vpack.c.b16 %v744, %v740
  %v1089 = vpack.c.b16 %v745, %v741
  %v1090 = vpack.c.b16 %v746, %v742
  %v1091 = vpack.c.b16 %v747, %v743
  %v1092 = vpack.c.b16 %v752, %v748
  %v1093 = vpack.c.b16 %v753, %v749
  %v1094 = vpack.c.b16 %v754, %v750
  %v1095 = vpack.c.b16 %v755, %v751
  %v1096 = vpack.c.b16 %v760, %v756
  %v1097 = vpack.c.b16 %v761, %v757
  %v1098 = vpack.c.b16 %v762, %v758
  %v1099 = vpack.c.b16 %v763, %v759
  %v1100 = vpack.c.b16 %v768, %v764
  %v1101 = vpack.c.b16 %v769, %v765
  %v1102 = vpack.c.b16 %v770, %v766
  %v1103 = vpack.c.b16 %v771, %v767
  %v1104 = vpack.c.b16 %v776, %v772
  %v1105 = vpack.c.b16 %v777, %v773
  %v1106 = vpack.c.b16 %v778, %v774
  %v1107 = vpack.c.b16 %v779, %v775
  %v1108 = vpack.c.b16 %v784, %v780
  %v1109 = vpack.c.b16 %v785, %v781
  %v1110 = vpack.c.b16 %v786, %v782
  %v1111 = vpack.c.b16 %v787, %v783
  %v1112 = vpack.c.b16 %v792, %v788
  %v1113 = vpack.c.b16 %v793, %v789
  %v1114 = vpack.c.b16 %v794, %v790
  %v1115 = vpack.c.b16 %v795, %v791
  %v1116 = vpack.c.b16 %v800, %v796
  %v1117 = vpack.c.b16 %v801, %v797
  %v1118 = vpack.c.b16 %v802, %v798
  %v1119 = vpack.c.b16 %v803, %v799
  %v1120 = vpack.c.b16 %v808, %v804
  %v1121 = vpack.c.b16 %v809, %v805
  %v1122 = vpack.c.b16 %v810, %v806
  %v1123 = vpack.c.b16 %v811, %v807
  %v1124 = vpack.c.b16 %v816, %v812
  %v1125 = vpack.c.b16 %v817, %v813
  %v1126 = vpack.c.b16 %v818, %v814
  %v1127 = vpack.c.b16 %v819, %v815
  %v1128 = vpack.c.b16 %v824, %v820
  %v1129 = vpack.c.b16 %v825, %v821
  %v1130 = vpack.c.b16 %v826, %v822
  %v1131 = vpack.c.b16 %v827, %v823
  %v1132 = vpack.c.b16 %v832, %v828
  %v1133 = vpack.c.b16 %v833, %v829
  %v1134 = vpack.c.b16 %v834, %v830
  %v1135 = vpack.c.b16 %v835, %v831
  %v1136 = vpack.c.b16 %v840, %v836
  %v1137 = vpack.c.b16 %v841, %v837
  %v1138 = vpack.c.b16 %v842, %v838
  %v1139 = vpack.c.b16 %v843, %v839
  %v1140 = vpack.c.b16 %v848, %v844
  %v1141 = vpack.c.b16 %v849, %v845
  %v1142 = vpack.c.b16 %v850, %v846
  %v1143 = vpack.c.b16 %v851, %v847
  %v1144 = vpack.c.b16 %v856, %v852
  %v1145 = vpack.c.b16 %v857, %v853
  %v1146 = vpack.c.b16 %v858, %v854
  %v1147 = vpack.c.b16 %v859, %v855
  %v1148 = vpack.c.b16 %v864, %v860
  %v1149 = vpack.c.b16 %v865, %v861
  %v1150 = vpack.c.b16 %v866, %v862
  %v1151 = vpack.c.b16 %v867, %v863
  %v1152 = vpack.c.b16 %v872, %v868
  %v1153 = vpack.c.b16 %v873, %v869
  %v1154 = vpack.c.b16 %v874, %v870
  %v1155 = vpack.c.b16 %v875, %v871
  %v1156 = vpack.c.b16 %v880, %v876
  %v1157 = vpack.c.b16 %v881, %v877
  %v1158 = vpack.c.b16 %v882, %v878
  %v1159 = vpack.c.b16 %v883, %v879
  %v1160 = vpack.c.b16 %v888, %v884
  %v1161 = vpack.c.b16 %v889, %v885
  %v1162 = vpack.c.b16 %v890, %v886
  %v1163 = vpack.c.b16 %v891, %v887
  %v1164 = vpack.c.b16 %v896, %v892
  %v1165 = vpack.c.b16 %v897, %v893
  %v1166 = vpack.c.b16 %v898, %v894
  %v1167 = vpack.c.b16 %v899, %v895
  %v1168 = vpack.c.b16 %v904, %v900
  %v1169 = vpack.c.b16 %v905, %v901
  %v1170 = vpack.c.b16 %v906, %v902
  %v1171 = vpack.c.b16 %v907, %v903
  %v1172 = vpack.c.b16 %v912, %v908
  %v1173 = vpack.c.b16 %v913, %v909
  %v1174 = vpack.c.b16 %v914, %v910
  %v1175 = vpack.c.b16 %v915, %v911
  %v1176 = vpack.c.b16 %v920, %v916
  %v1177 = vpack.c.b16 %v921, %v917
  %v1178 = vpack.c.b16 %v922, %v918
  %v1179 = vpack.c.b16 %v923, %v919
  %v1180 = vpack.c.b16 %v928, %v924
  %v1181 = vpack.c.b16 %v929, %v925
  %v1182 = vpack.c.b16 %v930, %v926
  %v1183 = vpack.c.b16 %v931, %v927
  %v1184 = vpack.c.b16 %v936, %v932
  %v1185 = vpack.c.b16 %v937, %v933
  %v1186 = vpack.c.b16 %v938, %v934
  %v1187 = vpack.c.b16 %v939, %v935
  %v1188 = vpack.c.b16 %v944, %v940
  %v1189 = vpack.c.b16 %v945, %v941
  %v1190 = vpack.c.b16 %v946, %v942
  %v1191 = vpack.c.b16 %v947, %v943
  %v1192 = vpack.c.b16 %v952, %v948
  %v1193 = vpack.c.b16 %v953, %v949
  %v1194 = vpack.c.b16 %v954, %v950
  %v1195 = vpack.c.b16 %v955, %v951
  %v1196 = vpack.c.b16 %v960, %v956
  %v1197 = vpack.c.b16 %v961, %v957
  %v1198 = vpack.c.b16 %v962, %v958
  %v1199 = vpack.c.b16 %v963, %v959
  %v1200 = vpack.c.b16 %v968, %v964
  %v1201 = vpack.c.b16 %v969, %v965
  %v1202 = vpack.c.b16 %v970, %v966
  %v1203 = vpack.c.b16 %v971, %v967
  %v1204 = vpack.c.b16 %v976, %v972
  %v1205 = vpack.c.b16 %v977, %v973
  %v1206 = vpack.c.b16 %v978, %v974
  %v1207 = vpack.c.b16 %v979, %v975
  %v1208 = vpack.c.b16 %v984, %v980
  %v1209 = vpack.c.b16 %v985, %v981
  %v1210 = vpack.c.b16 %v986, %v982
  %v1211 = vpack.c.b16 %v987, %v983
  %1436 = vmatprep.subr.bf16.mxu0 %v989
  %1437 = vmatpush1.bf16.msra.mxu0 %v988
  %1438 = vmatprep.subr.bf16.mxu0 %v993
  %1439 = vmatpush1.bf16.msra.mxu0 %v992
  %1440 = vmatprep.subr.bf16.mxu0 %v997
  %1441 = vmatpush1.bf16.msra.mxu0 %v996
  %1442 = vmatprep.subr.bf16.mxu0 %v1001
  %1443 = vmatpush1.bf16.msra.mxu0 %v1000
  %1444 = vmatprep.subr.bf16.mxu0 %v1005
  %1445 = vmatpush1.bf16.msra.mxu0 %v1004
  %1446 = vmatprep.subr.bf16.mxu0 %v1009
  %1447 = vmatpush1.bf16.msra.mxu0 %v1008
  %1448 = vmatprep.subr.bf16.mxu0 %v1013
  %1449 = vmatpush1.bf16.msra.mxu0 %v1012
  %1450 = vmatprep.subr.bf16.mxu0 %v1017
  %1451 = vmatpush1.bf16.msra.mxu0 %v1016
  %1452 = vmatprep.subr.bf16.mxu0 %v1021
  %1453 = vmatpush1.bf16.msra.mxu0 %v1020
  %1454 = vmatprep.subr.bf16.mxu0 %v1025
  %1455 = vmatpush1.bf16.msra.mxu0 %v1024
  %1456 = vmatprep.subr.bf16.mxu0 %v1029
  %1457 = vmatpush1.bf16.msra.mxu0 %v1028
  %1458 = vmatprep.subr.bf16.mxu0 %v1033
  %1459 = vmatpush1.bf16.msra.mxu0 %v1032
  %1460 = vmatprep.subr.bf16.mxu0 %v1037
  %1461 = vmatpush1.bf16.msra.mxu0 %v1036
  %1462 = vmatprep.subr.bf16.mxu0 %v1041
  %1463 = vmatpush1.bf16.msra.mxu0 %v1040
  %1464 = vmatprep.subr.bf16.mxu0 %v1045
  %1465 = vmatpush1.bf16.msra.mxu0 %v1044
  %1466 = vmatprep.subr.bf16.mxu0 %v1049
  %1467 = vmatpush1.bf16.msra.mxu0 %v1048
  %1468 = vmatprep.mubr.bf16.mxu0 %v64
  %1469 = vmatmul.mubr.bf16.gmra.mrb[0].mxu0 %v63
  %v1470 = vpop.f32.mrb[0].mxu0
  %v1471 = vadd.f32 %v299, %v1470
  %v1472 = vpop.f32.mrb[0].mxu0
  %v1473 = vadd.f32 %v303, %v1472
  %v1474 = vpop.f32.mrb[0].mxu0
  %v1475 = vadd.f32 %v299, %v1474
  %v1476 = vpop.f32.mrb[0].mxu0
  %v1477 = vadd.f32 %v303, %v1476
  %1478 = vdwg.mxu0
  %1479 = vmatprep.subr.bf16.mxu0 %v1053
  %1480 = vmatpush1.bf16.msra.mxu0 %v1052
  %1481 = vmatprep.subr.bf16.mxu0 %v1057
  %1482 = vmatpush1.bf16.msra.mxu0 %v1056
  %1483 = vmatprep.subr.bf16.mxu0 %v1061
  %1484 = vmatpush1.bf16.msra.mxu0 %v1060
  %1485 = vmatprep.subr.bf16.mxu0 %v1065
  %1486 = vmatpush1.bf16.msra.mxu0 %v1064
  %1487 = vmatprep.subr.bf16.mxu0 %v1069
  %1488 = vmatpush1.bf16.msra.mxu0 %v1068
  %1489 = vmatprep.subr.bf16.mxu0 %v1073
  %1490 = vmatpush1.bf16.msra.mxu0 %v1072
  %1491 = vmatprep.subr.bf16.mxu0 %v1077
  %1492 = vmatpush1.bf16.msra.mxu0 %v1076
  %1493 = vmatprep.subr.bf16.mxu0 %v1081
  %1494 = vmatpush1.bf16.msra.mxu0 %v1080
  %1495 = vmatprep.subr.bf16.mxu0 %v1085
  %1496 = vmatpush1.bf16.msra.mxu0 %v1084
  %1497 = vmatprep.subr.bf16.mxu0 %v1089
  %1498 = vmatpush1.bf16.msra.mxu0 %v1088
  %1499 = vmatprep.subr.bf16.mxu0 %v1093
  %1500 = vmatpush1.bf16.msra.mxu0 %v1092
  %1501 = vmatprep.subr.bf16.mxu0 %v1097
  %1502 = vmatpush1.bf16.msra.mxu0 %v1096
  %1503 = vmatprep.subr.bf16.mxu0 %v1101
  %1504 = vmatpush1.bf16.msra.mxu0 %v1100
  %1505 = vmatprep.subr.bf16.mxu0 %v1105
  %1506 = vmatpush1.bf16.msra.mxu0 %v1104
  %1507 = vmatprep.subr.bf16.mxu0 %v1109
  %1508 = vmatpush1.bf16.msra.mxu0 %v1108
  %1509 = vmatprep.subr.bf16.mxu0 %v1113
  %1510 = vmatpush1.bf16.msra.mxu0 %v1112
  %1511 = vmatprep.mubr.bf16.mxu0 %v66
  %1512 = vmatmul.mubr.bf16.gmra.mrb[0].mxu0 %v65
  %v1513 = vpop.f32.mrb[0].mxu0
  %v1514 = vadd.f32 %v1471, %v1513
  %v1515 = vpop.f32.mrb[0].mxu0
  %v1516 = vadd.f32 %v1473, %v1515
  %v1517 = vpop.f32.mrb[0].mxu0
  %v1518 = vadd.f32 %v1475, %v1517
  %v1519 = vpop.f32.mrb[0].mxu0
  %v1520 = vadd.f32 %v1477, %v1519
  %1521 = vdwg.mxu0
  %1522 = vmatprep.subr.bf16.mxu0 %v1117
  %1523 = vmatpush1.bf16.msra.mxu0 %v1116
  %1524 = vmatprep.subr.bf16.mxu0 %v1121
  %1525 = vmatpush1.bf16.msra.mxu0 %v1120
  %1526 = vmatprep.subr.bf16.mxu0 %v1125
  %1527 = vmatpush1.bf16.msra.mxu0 %v1124
  %1528 = vmatprep.subr.bf16.mxu0 %v1129
  %1529 = vmatpush1.bf16.msra.mxu0 %v1128
  %1530 = vmatprep.subr.bf16.mxu0 %v1133
  %1531 = vmatpush1.bf16.msra.mxu0 %v1132
  %1532 = vmatprep.subr.bf16.mxu0 %v1137
  %1533 = vmatpush1.bf16.msra.mxu0 %v1136
  %1534 = vmatprep.subr.bf16.mxu0 %v1141
  %1535 = vmatpush1.bf16.msra.mxu0 %v1140
  %1536 = vmatprep.subr.bf16.mxu0 %v1145
  %1537 = vmatpush1.bf16.msra.mxu0 %v1144
  %1538 = vmatprep.subr.bf16.mxu0 %v1149
  %1539 = vmatpush1.bf16.msra.mxu0 %v1148
  %1540 = vmatprep.subr.bf16.mxu0 %v1153
  %1541 = vmatpush1.bf16.msra.mxu0 %v1152
  %1542 = vmatprep.subr.bf16.mxu0 %v1157
  %1543 = vmatpush1.bf16.msra.mxu0 %v1156
  %1544 = vmatprep.subr.bf16.mxu0 %v1161
  %1545 = vmatpush1.bf16.msra.mxu0 %v1160
  %1546 = vmatprep.subr.bf16.mxu0 %v1165
  %1547 = vmatpush1.bf16.msra.mxu0 %v1164
  %1548 = vmatprep.subr.bf16.mxu0 %v1169
  %1549 = vmatpush1.bf16.msra.mxu0 %v1168
  %1550 = vmatprep.subr.bf16.mxu0 %v1173
  %1551 = vmatpush1.bf16.msra.mxu0 %v1172
  %1552 = vmatprep.subr.bf16.mxu0 %v1177
  %1553 = vmatpush1.bf16.msra.mxu0 %v1176
  %1554 = vmatprep.mubr.bf16.mxu0 %v68
  %1555 = vmatmul.mubr.bf16.gmra.mrb[0].mxu0 %v67
  %v1556 = vpop.f32.mrb[0].mxu0
  %v1557 = vadd.f32 %v1514, %v1556
  %v1558 = vpop.f32.mrb[0].mxu0
  %v1559 = vadd.f32 %v1516, %v1558
  %v1560 = vpop.f32.mrb[0].mxu0
  %v1561 = vadd.f32 %v1518, %v1560
  %v1562 = vpop.f32.mrb[0].mxu0
  %v1563 = vadd.f32 %v1520, %v1562
  %1564 = vdwg.mxu0
  %1565 = vmatprep.subr.bf16.mxu0 %v1181
  %1566 = vmatpush1.bf16.msra.mxu0 %v1180
  %1567 = vmatprep.subr.bf16.mxu0 %v1185
  %1568 = vmatpush1.bf16.msra.mxu0 %v1184
  %1569 = vmatprep.subr.bf16.mxu0 %v1189
  %1570 = vmatpush1.bf16.msra.mxu0 %v1188
  %1571 = vmatprep.subr.bf16.mxu0 %v1193
  %1572 = vmatpush1.bf16.msra.mxu0 %v1192
  %1573 = vmatprep.subr.bf16.mxu0 %v1197
  %1574 = vmatpush1.bf16.msra.mxu0 %v1196
  %1575 = vmatprep.subr.bf16.mxu0 %v1201
  %1576 = vmatpush1.bf16.msra.mxu0 %v1200
  %1577 = vmatprep.subr.bf16.mxu0 %v1205
  %1578 = vmatpush1.bf16.msra.mxu0 %v1204
  %1579 = vmatprep.subr.bf16.mxu0 %v1209
  %1580 = vmatpush1.bf16.msra.mxu0 %v1208
  %1581 = vmatprep.subr.bf16.mxu0 0
  %1582 = vmatpush1.bf16.msra.mxu0 0
  %1583 = vmatprep.subr.bf16.mxu0 0
  %1584 = vmatpush1.bf16.msra.mxu0 0
  %1585 = vmatprep.subr.bf16.mxu0 0
  %1586 = vmatpush1.bf16.msra.mxu0 0
  %1587 = vmatprep.subr.bf16.mxu0 0
  %1588 = vmatpush1.bf16.msra.mxu0 0
  %1589 = vmatprep.subr.bf16.mxu0 0
  %1590 = vmatpush1.bf16.msra.mxu0 0
  %1591 = vmatprep.subr.bf16.mxu0 0
  %1592 = vmatpush1.bf16.msra.mxu0 0
  %1593 = vmatprep.subr.bf16.mxu0 0
  %1594 = vmatpush1.bf16.msra.mxu0 0
  %1595 = vmatprep.subr.bf16.mxu0 0
  %1596 = vmatpush1.bf16.msra.mxu0 0
  %1597 = vmatprep.mubr.bf16.mxu0 0
  %1598 = vmatmul.mubr.bf16.gmra.mrb[0].mxu0 %v69
  %v1599 = vpop.f32.mrb[0].mxu0
  %v1600 = vadd.f32 %v1557, %v1599
  %v1601 = vpop.f32.mrb[0].mxu0
  %v1602 = vadd.f32 %v1559, %v1601
  %v1603 = vpop.f32.mrb[0].mxu0
  %v1604 = vadd.f32 %v1561, %v1603
  %v1605 = vpop.f32.mrb[0].mxu0
  %v1606 = vadd.f32 %v1563, %v1605
  %1607 = vdwg.mxu0
  %1608 = vmatprep.subr.bf16.mxu0 %v991
  %1609 = vmatpush1.bf16.msra.mxu0 %v990
  %1610 = vmatprep.subr.bf16.mxu0 %v995
  %1611 = vmatpush1.bf16.msra.mxu0 %v994
  %1612 = vmatprep.subr.bf16.mxu0 %v999
  %1613 = vmatpush1.bf16.msra.mxu0 %v998
  %1614 = vmatprep.subr.bf16.mxu0 %v1003
  %1615 = vmatpush1.bf16.msra.mxu0 %v1002
  %1616 = vmatprep.subr.bf16.mxu0 %v1007
  %1617 = vmatpush1.bf16.msra.mxu0 %v1006
  %1618 = vmatprep.subr.bf16.mxu0 %v1011
  %1619 = vmatpush1.bf16.msra.mxu0 %v1010
  %1620 = vmatprep.subr.bf16.mxu0 %v1015
  %1621 = vmatpush1.bf16.msra.mxu0 %v1014
  %1622 = vmatprep.subr.bf16.mxu0 %v1019
  %1623 = vmatpush1.bf16.msra.mxu0 %v1018
  %1624 = vmatprep.subr.bf16.mxu0 %v1023
  %1625 = vmatpush1.bf16.msra.mxu0 %v1022
  %1626 = vmatprep.subr.bf16.mxu0 %v1027
  %1627 = vmatpush1.bf16.msra.mxu0 %v1026
  %1628 = vmatprep.subr.bf16.mxu0 %v1031
  %1629 = vmatpush1.bf16.msra.mxu0 %v1030
  %1630 = vmatprep.subr.bf16.mxu0 %v1035
  %1631 = vmatpush1.bf16.msra.mxu0 %v1034
  %1632 = vmatprep.subr.bf16.mxu0 %v1039
  %1633 = vmatpush1.bf16.msra.mxu0 %v1038
  %1634 = vmatprep.subr.bf16.mxu0 %v1043
  %1635 = vmatpush1.bf16.msra.mxu0 %v1042
  %1636 = vmatprep.subr.bf16.mxu0 %v1047
  %1637 = vmatpush1.bf16.msra.mxu0 %v1046
  %1638 = vmatprep.subr.bf16.mxu0 %v1051
  %1639 = vmatpush1.bf16.msra.mxu0 %v1050
  %1640 = vmatprep.mubr.bf16.mxu0 %v64
  %1641 = vmatmul.mubr.bf16.gmra.mrb[0].mxu0 %v63
  %v1642 = vpop.f32.mrb[0].mxu0
  %v1643 = vadd.f32 %v307, %v1642
  %v1644 = vpop.f32.mrb[0].mxu0
  %v1645 = vadd.f32 %v311, %v1644
  %v1646 = vpop.f32.mrb[0].mxu0
  %v1647 = vadd.f32 %v307, %v1646
  %v1648 = vpop.f32.mrb[0].mxu0
  %v1649 = vadd.f32 %v311, %v1648
  %1650 = vdwg.mxu0
  %1651 = vmatprep.subr.bf16.mxu0 %v1055
  %1652 = vmatpush1.bf16.msra.mxu0 %v1054
  %1653 = vmatprep.subr.bf16.mxu0 %v1059
  %1654 = vmatpush1.bf16.msra.mxu0 %v1058
  %1655 = vmatprep.subr.bf16.mxu0 %v1063
  %1656 = vmatpush1.bf16.msra.mxu0 %v1062
  %1657 = vmatprep.subr.bf16.mxu0 %v1067
  %1658 = vmatpush1.bf16.msra.mxu0 %v1066
  %1659 = vmatprep.subr.bf16.mxu0 %v1071
  %1660 = vmatpush1.bf16.msra.mxu0 %v1070
  %1661 = vmatprep.subr.bf16.mxu0 %v1075
  %1662 = vmatpush1.bf16.msra.mxu0 %v1074
  %1663 = vmatprep.subr.bf16.mxu0 %v1079
  %1664 = vmatpush1.bf16.msra.mxu0 %v1078
  %1665 = vmatprep.subr.bf16.mxu0 %v1083
  %1666 = vmatpush1.bf16.msra.mxu0 %v1082
  %1667 = vmatprep.subr.bf16.mxu0 %v1087
  %1668 = vmatpush1.bf16.msra.mxu0 %v1086
  %1669 = vmatprep.subr.bf16.mxu0 %v1091
  %1670 = vmatpush1.bf16.msra.mxu0 %v1090
  %1671 = vmatprep.subr.bf16.mxu0 %v1095
  %1672 = vmatpush1.bf16.msra.mxu0 %v1094
  %1673 = vmatprep.subr.bf16.mxu0 %v1099
  %1674 = vmatpush1.bf16.msra.mxu0 %v1098
  %1675 = vmatprep.subr.bf16.mxu0 %v1103
  %1676 = vmatpush1.bf16.msra.mxu0 %v1102
  %1677 = vmatprep.subr.bf16.mxu0 %v1107
  %1678 = vmatpush1.bf16.msra.mxu0 %v1106
  %1679 = vmatprep.subr.bf16.mxu0 %v1111
  %1680 = vmatpush1.bf16.msra.mxu0 %v1110
  %1681 = vmatprep.subr.bf16.mxu0 %v1115
  %1682 = vmatpush1.bf16.msra.mxu0 %v1114
  %1683 = vmatprep.mubr.bf16.mxu0 %v66
  %1684 = vmatmul.mubr.bf16.gmra.mrb[0].mxu0 %v65
  %v1685 = vpop.f32.mrb[0].mxu0
  %v1686 = vadd.f32 %v1643, %v1685
  %v1687 = vpop.f32.mrb[0].mxu0
  %v1688 = vadd.f32 %v1645, %v1687
  %v1689 = vpop.f32.mrb[0].mxu0
  %v1690 = vadd.f32 %v1647, %v1689
  %v1691 = vpop.f32.mrb[0].mxu0
  %v1692 = vadd.f32 %v1649, %v1691
  %1693 = vdwg.mxu0
  %1694 = vmatprep.subr.bf16.mxu0 %v1119
  %1695 = vmatpush1.bf16.msra.mxu0 %v1118
  %1696 = vmatprep.subr.bf16.mxu0 %v1123
  %1697 = vmatpush1.bf16.msra.mxu0 %v1122
  %1698 = vmatprep.subr.bf16.mxu0 %v1127
  %1699 = vmatpush1.bf16.msra.mxu0 %v1126
  %1700 = vmatprep.subr.bf16.mxu0 %v1131
  %1701 = vmatpush1.bf16.msra.mxu0 %v1130
  %1702 = vmatprep.subr.bf16.mxu0 %v1135
  %1703 = vmatpush1.bf16.msra.mxu0 %v1134
  %1704 = vmatprep.subr.bf16.mxu0 %v1139
  %1705 = vmatpush1.bf16.msra.mxu0 %v1138
  %1706 = vmatprep.subr.bf16.mxu0 %v1143
  %1707 = vmatpush1.bf16.msra.mxu0 %v1142
  %1708 = vmatprep.subr.bf16.mxu0 %v1147
  %1709 = vmatpush1.bf16.msra.mxu0 %v1146
  %1710 = vmatprep.subr.bf16.mxu0 %v1151
  %1711 = vmatpush1.bf16.msra.mxu0 %v1150
  %1712 = vmatprep.subr.bf16.mxu0 %v1155
  %1713 = vmatpush1.bf16.msra.mxu0 %v1154
  %1714 = vmatprep.subr.bf16.mxu0 %v1159
  %1715 = vmatpush1.bf16.msra.mxu0 %v1158
  %1716 = vmatprep.subr.bf16.mxu0 %v1163
  %1717 = vmatpush1.bf16.msra.mxu0 %v1162
  %1718 = vmatprep.subr.bf16.mxu0 %v1167
  %1719 = vmatpush1.bf16.msra.mxu0 %v1166
  %1720 = vmatprep.subr.bf16.mxu0 %v1171
  %1721 = vmatpush1.bf16.msra.mxu0 %v1170
  %1722 = vmatprep.subr.bf16.mxu0 %v1175
  %1723 = vmatpush1.bf16.msra.mxu0 %v1174
  %1724 = vmatprep.subr.bf16.mxu0 %v1179
  %1725 = vmatpush1.bf16.msra.mxu0 %v1178
  %1726 = vmatprep.mubr.bf16.mxu0 %v68
  %1727 = vmatmul.mubr.bf16.gmra.mrb[0].mxu0 %v67
  %v1728 = vpop.f32.mrb[0].mxu0
  %v1729 = vadd.f32 %v1686, %v1728
  %v1730 = vpop.f32.mrb[0].mxu0
  %v1731 = vadd.f32 %v1688, %v1730
  %v1732 = vpop.f32.mrb[0].mxu0
  %v1733 = vadd.f32 %v1690, %v1732
  %v1734 = vpop.f32.mrb[0].mxu0
  %v1735 = vadd.f32 %v1692, %v1734
  %1736 = vdwg.mxu0
  %1737 = vmatprep.subr.bf16.mxu0 %v1183
  %1738 = vmatpush1.bf16.msra.mxu0 %v1182
  %1739 = vmatprep.subr.bf16.mxu0 %v1187
  %1740 = vmatpush1.bf16.msra.mxu0 %v1186
  %1741 = vmatprep.subr.bf16.mxu0 %v1191
  %1742 = vmatpush1.bf16.msra.mxu0 %v1190
  %1743 = vmatprep.subr.bf16.mxu0 %v1195
  %1744 = vmatpush1.bf16.msra.mxu0 %v1194
  %1745 = vmatprep.subr.bf16.mxu0 %v1199
  %1746 = vmatpush1.bf16.msra.mxu0 %v1198
  %1747 = vmatprep.subr.bf16.mxu0 %v1203
  %1748 = vmatpush1.bf16.msra.mxu0 %v1202
  %1749 = vmatprep.subr.bf16.mxu0 %v1207
  %1750 = vmatpush1.bf16.msra.mxu0 %v1206
  %1751 = vmatprep.subr.bf16.mxu0 %v1211
  %1752 = vmatpush1.bf16.msra.mxu0 %v1210
  %1753 = vmatprep.subr.bf16.mxu0 0
  %1754 = vmatpush1.bf16.msra.mxu0 0
  %1755 = vmatprep.subr.bf16.mxu0 0
  %1756 = vmatpush1.bf16.msra.mxu0 0
  %1757 = vmatprep.subr.bf16.mxu0 0
  %1758 = vmatpush1.bf16.msra.mxu0 0
  %1759 = vmatprep.subr.bf16.mxu0 0
  %1760 = vmatpush1.bf16.msra.mxu0 0
  %1761 = vmatprep.subr.bf16.mxu0 0
  %1762 = vmatpush1.bf16.msra.mxu0 0
  %1763 = vmatprep.subr.bf16.mxu0 0
  %1764 = vmatpush1.bf16.msra.mxu0 0
  %1765 = vmatprep.subr.bf16.mxu0 0
  %1766 = vmatpush1.bf16.msra.mxu0 0
  %1767 = vmatprep.subr.bf16.mxu0 0
  %1768 = vmatpush1.bf16.msra.mxu0 0
  %1769 = vmatprep.mubr.bf16.mxu0 0
  %1770 = vmatmul.mubr.bf16.gmra.mrb[0].mxu0 %v69
  %v1771 = vpop.f32.mrb[0].mxu0
  %v1772 = vadd.f32 %v1729, %v1771
  %v1773 = vpop.f32.mrb[0].mxu0
  %v1774 = vadd.f32 %v1731, %v1773
  %v1775 = vpop.f32.mrb[0].mxu0
  %v1776 = vadd.f32 %v1733, %v1775
  %v1777 = vpop.f32.mrb[0].mxu0
  %v1778 = vadd.f32 %v1735, %v1777
  %1779 = vdwg.mxu0
  %v1780 = vmax.f32 %v1600, 0.0
  %v1781 = vmax.f32 %v1602, 0.0
  %v1782 = vmax.f32 %v1772, 0.0
  %v1783 = vmax.f32 %v1774, 0.0
  %v1784 = vmax.f32 %v1604, 0.0
  %v1785 = vmax.f32 %v1606, 0.0
  %v1786 = vmax.f32 %v1776, 0.0
  %v1787 = vmax.f32 %v1778, 0.0
  %v1788 = vpack.c.bf16 %v1784, %v1780
  %v1789 = vpack.c.bf16 %v1785, %v1781
  %v1790 = vpack.c.bf16 %v1786, %v1782
  %v1791 = vpack.c.bf16 %v1787, %v1783
  %v1792 = vld [vmem:[%s3] sm:$0xff]
  %v1793 = vld [vmem:[%s3 + $0x8] sm:$0xf]
  %v1794 = vld [vmem:[%s3 + $0xc] sm:$0xff]
  %v1795 = vld [vmem:[%s3 + $0x14] sm:$0xf]
  %v1796 = vld [vmem:[%s3 + $0x18] sm:$0xff]
  %v1797 = vld [vmem:[%s3 + $0x20] sm:$0xf]
  %v1798 = vld [vmem:[%s3 + $0x24] sm:$0xff]
  %v1799 = vld [vmem:[%s3 + $0x2c] sm:$0xf]
  %v1800 = vld [vmem:[%s3 + $0x30] sm:$0xff]
  %v1801 = vld [vmem:[%s3 + $0x38] sm:$0xf]
  %v1802 = vld [vmem:[%s3 + $0x3c] sm:$0xff]
  %v1803 = vld [vmem:[%s3 + $0x44] sm:$0xf]
  %v1804 = vld [vmem:[%s3 + $0x48] sm:$0xff]
  %v1805 = vld [vmem:[%s3 + $0x50] sm:$0xf]
  %v1806 = vld [vmem:[%s3 + $0x54] sm:$0xff]
  %v1807 = vld [vmem:[%s3 + $0x5c] sm:$0xf]
  %v1808 = vld [vmem:[%s3 + $0x60] sm:$0xff]
  %v1809 = vld [vmem:[%s3 + $0x68] sm:$0xf]
  %v1810 = vld [vmem:[%s3 + $0x6c] sm:$0xff]
  %v1811 = vld [vmem:[%s3 + $0x74] sm:$0xf]
  %v1812 = vld [vmem:[%s3 + $0x78] sm:$0xff]
  %v1813 = vld [vmem:[%s3 + $0x80] sm:$0xf]
  %v1814 = vld [vmem:[%s3 + $0x84] sm:$0xff]
  %v1815 = vld [vmem:[%s3 + $0x8c] sm:$0xf]
  %v1816 = vld [vmem:[%s3 + $0x90] sm:$0xff]
  %v1817 = vld [vmem:[%s3 + $0x98] sm:$0xf]
  %v1818 = vld [vmem:[%s3 + $0x9c] sm:$0xff]
  %v1819 = vld [vmem:[%s3 + $0xa4] sm:$0xf]
  %v1820 = vld [vmem:[%s3 + $0xa8] sm:$0xff]
  %v1821 = vld [vmem:[%s3 + $0xb0] sm:$0xf]
  %v1822 = vld [vmem:[%s3 + $0xb4] sm:$0xff]
  %v1823 = vld [vmem:[%s3 + $0xbc] sm:$0xf]
  %v1824 = vld [vmem:[%s3 + $0xc0] sm:$0xff]
  %v1825 = vld [vmem:[%s3 + $0xc8] sm:$0xf]
  %v1826 = vld [vmem:[%s3 + $0xcc] sm:$0xff]
  %v1827 = vld [vmem:[%s3 + $0xd4] sm:$0xf]
  %v1828 = vld [vmem:[%s3 + $0xd8] sm:$0xff]
  %v1829 = vld [vmem:[%s3 + $0xe0] sm:$0xf]
  %v1830 = vld [vmem:[%s3 + $0xe4] sm:$0xff]
  %v1831 = vld [vmem:[%s3 + $0xec] sm:$0xf]
  %v1832 = vld [vmem:[%s3 + $0xf0] sm:$0xff]
  %v1833 = vld [vmem:[%s3 + $0xf8] sm:$0xf]
  %v1834 = vld [vmem:[%s3 + $0xfc] sm:$0xff]
  %v1835 = vld [vmem:[%s3 + $0x104] sm:$0xf]
  %v1836 = vld [vmem:[%s3 + $0x108] sm:$0xff]
  %v1837 = vld [vmem:[%s3 + $0x110] sm:$0xf]
  %v1838 = vld [vmem:[%s3 + $0x114] sm:$0xff]
  %v1839 = vld [vmem:[%s3 + $0x11c] sm:$0xf]
  %v1840 = vld [vmem:[%s3 + $0x120] sm:$0xff]
  %v1841 = vld [vmem:[%s3 + $0x128] sm:$0xf]
  %v1842 = vld [vmem:[%s3 + $0x12c] sm:$0xff]
  %v1843 = vld [vmem:[%s3 + $0x134] sm:$0xf]
  %v1844 = vld [vmem:[%s3 + $0x138] sm:$0xff]
  %v1845 = vld [vmem:[%s3 + $0x140] sm:$0xf]
  %v1846 = vld [vmem:[%s3 + $0x144] sm:$0xff]
  %v1847 = vld [vmem:[%s3 + $0x14c] sm:$0xf]
  %v1848 = vld [vmem:[%s3 + $0x150] sm:$0xff]
  %v1849 = vld [vmem:[%s3 + $0x158] sm:$0xf]
  %v1850 = vld [vmem:[%s3 + $0x15c] sm:$0xff]
  %v1851 = vld [vmem:[%s3 + $0x164] sm:$0xf]
  %v1852 = vld [vmem:[%s3 + $0x168] sm:$0xff]
  %v1853 = vld [vmem:[%s3 + $0x170] sm:$0xf]
  %v1854 = vld [vmem:[%s3 + $0x174] sm:$0xff]
  %v1855 = vld [vmem:[%s3 + $0x17c] sm:$0xf]
  %v1856 = vld [vmem:[%s3 + $0x180] sm:$0xff]
  %v1857 = vld [vmem:[%s3 + $0x188] sm:$0xf]
  %v1858 = vld [vmem:[%s3 + $0x18c] sm:$0xff]
  %v1859 = vld [vmem:[%s3 + $0x194] sm:$0xf]
  %v1860 = vld [vmem:[%s3 + $0x198] sm:$0xff]
  %v1861 = vld [vmem:[%s3 + $0x1a0] sm:$0xf]
  %v1862 = vld [vmem:[%s3 + $0x1a4] sm:$0xff]
  %v1863 = vld [vmem:[%s3 + $0x1ac] sm:$0xf]
  %v1864 = vld [vmem:[%s3 + $0x1b0] sm:$0xff]
  %v1865 = vld [vmem:[%s3 + $0x1b8] sm:$0xf]
  %v1866 = vld [vmem:[%s3 + $0x1bc] sm:$0xff]
  %v1867 = vld [vmem:[%s3 + $0x1c4] sm:$0xf]
  %v1868 = vld [vmem:[%s3 + $0x1c8] sm:$0xff]
  %v1869 = vld [vmem:[%s3 + $0x1d0] sm:$0xf]
  %v1870 = vld [vmem:[%s3 + $0x1d4] sm:$0xff]
  %v1871 = vld [vmem:[%s3 + $0x1dc] sm:$0xf]
  %v1872 = vld [vmem:[%s3 + $0x1e0] sm:$0xff]
  %v1873 = vld [vmem:[%s3 + $0x1e8] sm:$0xf]
  %v1874 = vld [vmem:[%s3 + $0x1ec] sm:$0xff]
  %v1875 = vld [vmem:[%s3 + $0x1f4] sm:$0xf]
  %v1876 = vld [vmem:[%s3 + $0x1f8] sm:$0xff]
  %v1877 = vld [vmem:[%s3 + $0x200] sm:$0xf]
  %v1878 = vld [vmem:[%s3 + $0x204] sm:$0xff]
  %v1879 = vld [vmem:[%s3 + $0x20c] sm:$0xf]
  %v1880 = vld [vmem:[%s3 + $0x210] sm:$0xff]
  %v1881 = vld [vmem:[%s3 + $0x218] sm:$0xf]
  %v1882 = vld [vmem:[%s3 + $0x21c] sm:$0xff]
  %v1883 = vld [vmem:[%s3 + $0x224] sm:$0xf]
  %v1884 = vld [vmem:[%s3 + $0x228] sm:$0xff]
  %v1885 = vld [vmem:[%s3 + $0x230] sm:$0xf]
  %v1886 = vld [vmem:[%s3 + $0x234] sm:$0xff]
  %v1887 = vld [vmem:[%s3 + $0x23c] sm:$0xf]
  %v1888 = vld [vmem:[%s3 + $0x240] sm:$0xff]
  %v1889 = vld [vmem:[%s3 + $0x248] sm:$0xf]
  %v1890 = vld [vmem:[%s3 + $0x24c] sm:$0xff]
  %v1891 = vld [vmem:[%s3 + $0x254] sm:$0xf]
  %v1892 = vld [vmem:[%s3 + $0x258] sm:$0xff]
  %v1893 = vld [vmem:[%s3 + $0x260] sm:$0xf]
  %v1894 = vld [vmem:[%s3 + $0x264] sm:$0xff]
  %v1895 = vld [vmem:[%s3 + $0x26c] sm:$0xf]
  %v1896 = vld [vmem:[%s3 + $0x270] sm:$0xff]
  %v1897 = vld [vmem:[%s3 + $0x278] sm:$0xf]
  %v1898 = vld [vmem:[%s3 + $0x27c] sm:$0xff]
  %v1899 = vld [vmem:[%s3 + $0x284] sm:$0xf]
  %v1900 = vld [vmem:[%s3 + $0x288] sm:$0xff]
  %v1901 = vld [vmem:[%s3 + $0x290] sm:$0xf]
  %v1902 = vld [vmem:[%s3 + $0x294] sm:$0xff]
  %v1903 = vld [vmem:[%s3 + $0x29c] sm:$0xf]
  %v1904 = vld [vmem:[%s3 + $0x2a0] sm:$0xff]
  %v1905 = vld [vmem:[%s3 + $0x2a8] sm:$0xf]
  %v1906 = vld [vmem:[%s3 + $0x2ac] sm:$0xff]
  %v1907 = vld [vmem:[%s3 + $0x2b4] sm:$0xf]
  %v1908 = vld [vmem:[%s3 + $0x2b8] sm:$0xff]
  %v1909 = vld [vmem:[%s3 + $0x2c0] sm:$0xf]
  %v1910 = vld [vmem:[%s3 + $0x2c4] sm:$0xff]
  %v1911 = vld [vmem:[%s3 + $0x2cc] sm:$0xf]
  %v1912 = vld [vmem:[%s3 + $0x2d0] sm:$0xff]
  %v1913 = vld [vmem:[%s3 + $0x2d8] sm:$0xf]
  %v1914 = vld [vmem:[%s3 + $0x2dc] sm:$0xff]
  %v1915 = vld [vmem:[%s3 + $0x2e4] sm:$0xf]
  %v1916 = vld [vmem:[%s3 + $0x2e8] sm:$0xff]
  %v1917 = vld [vmem:[%s3 + $0x2f0] sm:$0xf]
  %v1918 = vld [vmem:[%s3 + $0x2f4] sm:$0xff]
  %v1919 = vld [vmem:[%s3 + $0x2fc] sm:$0xf]
  %v1920 = vld [vmem:[%s4] sm:$0x7]
  %v1922 = vlaneseq
  %v1923 = vshrl.u32 %v1922, 7
  %v1924 = vsub.s32 0, %v1923
  %v1925 = vrot.slane %v1920, %v1924
  %v1926 = vlaneseq
  %v1927 = vshrl.u32 %v1926, 7
  %v1928 = vsub.s32 1, %v1927
  %v1929 = vrot.slane %v1920, %v1928
  %v1930 = vlaneseq
  %v1931 = vshrl.u32 %v1930, 7
  %v1932 = vsub.s32 2, %v1931
  %v1933 = vrot.slane %v1920, %v1932
  %v2065 = vunpack.c.l.b16 %v1792
  %v2066 = vunpack.c.h.b16 %v1792
  %v2067 = vunpack.c.l.b16 %v1793
  %v2068 = vunpack.c.l.b16 %v1794
  %v2069 = vunpack.c.h.b16 %v1794
  %v2070 = vunpack.c.l.b16 %v1795
  %v2071 = vunpack.c.l.b16 %v1796
  %v2072 = vunpack.c.h.b16 %v1796
  %v2073 = vunpack.c.l.b16 %v1797
  %v2074 = vunpack.c.l.b16 %v1798
  %v2075 = vunpack.c.h.b16 %v1798
  %v2076 = vunpack.c.l.b16 %v1799
  %v2077 = vunpack.c.l.b16 %v1800
  %v2078 = vunpack.c.h.b16 %v1800
  %v2079 = vunpack.c.l.b16 %v1801
  %v2080 = vunpack.c.l.b16 %v1802
  %v2081 = vunpack.c.h.b16 %v1802
  %v2082 = vunpack.c.l.b16 %v1803
  %v2083 = vunpack.c.l.b16 %v1804
  %v2084 = vunpack.c.h.b16 %v1804
  %v2085 = vunpack.c.l.b16 %v1805
  %v2086 = vunpack.c.l.b16 %v1806
  %v2087 = vunpack.c.h.b16 %v1806
  %v2088 = vunpack.c.l.b16 %v1807
  %v2089 = vunpack.c.l.b16 %v1808
  %v2090 = vunpack.c.h.b16 %v1808
  %v2091 = vunpack.c.l.b16 %v1809
  %v2092 = vunpack.c.l.b16 %v1810
  %v2093 = vunpack.c.h.b16 %v1810
  %v2094 = vunpack.c.l.b16 %v1811
  %v2095 = vunpack.c.l.b16 %v1812
  %v2096 = vunpack.c.h.b16 %v1812
  %v2097 = vunpack.c.l.b16 %v1813
  %v2098 = vunpack.c.l.b16 %v1814
  %v2099 = vunpack.c.h.b16 %v1814
  %v2100 = vunpack.c.l.b16 %v1815
  %v2101 = vunpack.c.l.b16 %v1816
  %v2102 = vunpack.c.h.b16 %v1816
  %v2103 = vunpack.c.l.b16 %v1817
  %v2104 = vunpack.c.l.b16 %v1818
  %v2105 = vunpack.c.h.b16 %v1818
  %v2106 = vunpack.c.l.b16 %v1819
  %v2107 = vunpack.c.l.b16 %v1820
  %v2108 = vunpack.c.h.b16 %v1820
  %v2109 = vunpack.c.l.b16 %v1821
  %v2110 = vunpack.c.l.b16 %v1822
  %v2111 = vunpack.c.h.b16 %v1822
  %v2112 = vunpack.c.l.b16 %v1823
  %v2113 = vunpack.c.l.b16 %v1824
  %v2114 = vunpack.c.h.b16 %v1824
  %v2115 = vunpack.c.l.b16 %v1825
  %v2116 = vunpack.c.l.b16 %v1826
  %v2117 = vunpack.c.h.b16 %v1826
  %v2118 = vunpack.c.l.b16 %v1827
  %v2119 = vunpack.c.l.b16 %v1828
  %v2120 = vunpack.c.h.b16 %v1828
  %v2121 = vunpack.c.l.b16 %v1829
  %v2122 = vunpack.c.l.b16 %v1830
  %v2123 = vunpack.c.h.b16 %v1830
  %v2124 = vunpack.c.l.b16 %v1831
  %v2125 = vunpack.c.l.b16 %v1832
  %v2126 = vunpack.c.h.b16 %v1832
  %v2127 = vunpack.c.l.b16 %v1833
  %v2128 = vunpack.c.l.b16 %v1834
  %v2129 = vunpack.c.h.b16 %v1834
  %v2130 = vunpack.c.l.b16 %v1835
  %v2131 = vunpack.c.l.b16 %v1836
  %v2132 = vunpack.c.h.b16 %v1836
  %v2133 = vunpack.c.l.b16 %v1837
  %v2134 = vunpack.c.l.b16 %v1838
  %v2135 = vunpack.c.h.b16 %v1838
  %v2136 = vunpack.c.l.b16 %v1839
  %v2137 = vunpack.c.l.b16 %v1840
  %v2138 = vunpack.c.h.b16 %v1840
  %v2139 = vunpack.c.l.b16 %v1841
  %v2140 = vunpack.c.l.b16 %v1842
  %v2141 = vunpack.c.h.b16 %v1842
  %v2142 = vunpack.c.l.b16 %v1843
  %v2143 = vunpack.c.l.b16 %v1844
  %v2144 = vunpack.c.h.b16 %v1844
  %v2145 = vunpack.c.l.b16 %v1845
  %v2146 = vunpack.c.l.b16 %v1846
  %v2147 = vunpack.c.h.b16 %v1846
  %v2148 = vunpack.c.l.b16 %v1847
  %v2149 = vunpack.c.l.b16 %v1848
  %v2150 = vunpack.c.h.b16 %v1848
  %v2151 = vunpack.c.l.b16 %v1849
  %v2152 = vunpack.c.l.b16 %v1850
  %v2153 = vunpack.c.h.b16 %v1850
  %v2154 = vunpack.c.l.b16 %v1851
  %v2155 = vunpack.c.l.b16 %v1852
  %v2156 = vunpack.c.h.b16 %v1852
  %v2157 = vunpack.c.l.b16 %v1853
  %v2158 = vunpack.c.l.b16 %v1854
  %v2159 = vunpack.c.h.b16 %v1854
  %v2160 = vunpack.c.l.b16 %v1855
  %v2161 = vunpack.c.l.b16 %v1856
  %v2162 = vunpack.c.h.b16 %v1856
  %v2163 = vunpack.c.l.b16 %v1857
  %v2164 = vunpack.c.l.b16 %v1858
  %v2165 = vunpack.c.h.b16 %v1858
  %v2166 = vunpack.c.l.b16 %v1859
  %v2167 = vunpack.c.l.b16 %v1860
  %v2168 = vunpack.c.h.b16 %v1860
  %v2169 = vunpack.c.l.b16 %v1861
  %v2170 = vunpack.c.l.b16 %v1862
  %v2171 = vunpack.c.h.b16 %v1862
  %v2172 = vunpack.c.l.b16 %v1863
  %v2173 = vunpack.c.l.b16 %v1864
  %v2174 = vunpack.c.h.b16 %v1864
  %v2175 = vunpack.c.l.b16 %v1865
  %v2176 = vunpack.c.l.b16 %v1866
  %v2177 = vunpack.c.h.b16 %v1866
  %v2178 = vunpack.c.l.b16 %v1867
  %v2179 = vunpack.c.l.b16 %v1868
  %v2180 = vunpack.c.h.b16 %v1868
  %v2181 = vunpack.c.l.b16 %v1869
  %v2182 = vunpack.c.l.b16 %v1870
  %v2183 = vunpack.c.h.b16 %v1870
  %v2184 = vunpack.c.l.b16 %v1871
  %v2185 = vunpack.c.l.b16 %v1872
  %v2186 = vunpack.c.h.b16 %v1872
  %v2187 = vunpack.c.l.b16 %v1873
  %v2188 = vunpack.c.l.b16 %v1874
  %v2189 = vunpack.c.h.b16 %v1874
  %v2190 = vunpack.c.l.b16 %v1875
  %v2191 = vunpack.c.l.b16 %v1876
  %v2192 = vunpack.c.h.b16 %v1876
  %v2193 = vunpack.c.l.b16 %v1877
  %v2194 = vunpack.c.l.b16 %v1878
  %v2195 = vunpack.c.h.b16 %v1878
  %v2196 = vunpack.c.l.b16 %v1879
  %v2197 = vunpack.c.l.b16 %v1880
  %v2198 = vunpack.c.h.b16 %v1880
  %v2199 = vunpack.c.l.b16 %v1881
  %v2200 = vunpack.c.l.b16 %v1882
  %v2201 = vunpack.c.h.b16 %v1882
  %v2202 = vunpack.c.l.b16 %v1883
  %v2203 = vunpack.c.l.b16 %v1884
  %v2204 = vunpack.c.h.b16 %v1884
  %v2205 = vunpack.c.l.b16 %v1885
  %v2206 = vunpack.c.l.b16 %v1886
  %v2207 = vunpack.c.h.b16 %v1886
  %v2208 = vunpack.c.l.b16 %v1887
  %v2209 = vunpack.c.l.b16 %v1888
  %v2210 = vunpack.c.h.b16 %v1888
  %v2211 = vunpack.c.l.b16 %v1889
  %v2212 = vunpack.c.l.b16 %v1890
  %v2213 = vunpack.c.h.b16 %v1890
  %v2214 = vunpack.c.l.b16 %v1891
  %v2215 = vunpack.c.l.b16 %v1892
  %v2216 = vunpack.c.h.b16 %v1892
  %v2217 = vunpack.c.l.b16 %v1893
  %v2218 = vunpack.c.l.b16 %v1894
  %v2219 = vunpack.c.h.b16 %v1894
  %v2220 = vunpack.c.l.b16 %v1895
  %v2221 = vunpack.c.l.b16 %v1896
  %v2222 = vunpack.c.h.b16 %v1896
  %v2223 = vunpack.c.l.b16 %v1897
  %v2224 = vunpack.c.l.b16 %v1898
  %v2225 = vunpack.c.h.b16 %v1898
  %v2226 = vunpack.c.l.b16 %v1899
  %v2227 = vunpack.c.l.b16 %v1900
  %v2228 = vunpack.c.h.b16 %v1900
  %v2229 = vunpack.c.l.b16 %v1901
  %v2230 = vunpack.c.l.b16 %v1902
  %v2231 = vunpack.c.h.b16 %v1902
  %v2232 = vunpack.c.l.b16 %v1903
  %v2233 = vunpack.c.l.b16 %v1904
  %v2234 = vunpack.c.h.b16 %v1904
  %v2235 = vunpack.c.l.b16 %v1905
  %v2236 = vunpack.c.l.b16 %v1906
  %v2237 = vunpack.c.h.b16 %v1906
  %v2238 = vunpack.c.l.b16 %v1907
  %v2239 = vunpack.c.l.b16 %v1908
  %v2240 = vunpack.c.h.b16 %v1908
  %v2241 = vunpack.c.l.b16 %v1909
  %v2242 = vunpack.c.l.b16 %v1910
  %v2243 = vunpack.c.h.b16 %v1910
  %v2244 = vunpack.c.l.b16 %v1911
  %v2245 = vunpack.c.l.b16 %v1912
  %v2246 = vunpack.c.h.b16 %v1912
  %v2247 = vunpack.c.l.b16 %v1913
  %v2248 = vunpack.c.l.b16 %v1914
  %v2249 = vunpack.c.h.b16 %v1914
  %v2250 = vunpack.c.l.b16 %v1915
  %v2251 = vunpack.c.l.b16 %v1916
  %v2252 = vunpack.c.h.b16 %v1916
  %v2253 = vunpack.c.l.b16 %v1917
  %v2254 = vunpack.c.l.b16 %v1918
  %v2255 = vunpack.c.h.b16 %v1918
  %v2256 = vunpack.c.l.b16 %v1919
  %v2257 = vpack.c.b16 %v2068, %v2065
  %v2258 = vpack.c.b16 %v2069, %v2066
  %v2259 = vpack.c.b16 %v2070, %v2067
  %v2260 = vpack.c.b16 %v2074, %v2071
  %v2261 = vpack.c.b16 %v2075, %v2072
  %v2262 = vpack.c.b16 %v2076, %v2073
  %v2263 = vpack.c.b16 %v2080, %v2077
  %v2264 = vpack.c.b16 %v2081, %v2078
  %v2265 = vpack.c.b16 %v2082, %v2079
  %v2266 = vpack.c.b16 %v2086, %v2083
  %v2267 = vpack.c.b16 %v2087, %v2084
  %v2268 = vpack.c.b16 %v2088, %v2085
  %v2269 = vpack.c.b16 %v2092, %v2089
  %v2270 = vpack.c.b16 %v2093, %v2090
  %v2271 = vpack.c.b16 %v2094, %v2091
  %v2272 = vpack.c.b16 %v2098, %v2095
  %v2273 = vpack.c.b16 %v2099, %v2096
  %v2274 = vpack.c.b16 %v2100, %v2097
  %v2275 = vpack.c.b16 %v2104, %v2101
  %v2276 = vpack.c.b16 %v2105, %v2102
  %v2277 = vpack.c.b16 %v2106, %v2103
  %v2278 = vpack.c.b16 %v2110, %v2107
  %v2279 = vpack.c.b16 %v2111, %v2108
  %v2280 = vpack.c.b16 %v2112, %v2109
  %v2281 = vpack.c.b16 %v2116, %v2113
  %v2282 = vpack.c.b16 %v2117, %v2114
  %v2283 = vpack.c.b16 %v2118, %v2115
  %v2284 = vpack.c.b16 %v2122, %v2119
  %v2285 = vpack.c.b16 %v2123, %v2120
  %v2286 = vpack.c.b16 %v2124, %v2121
  %v2287 = vpack.c.b16 %v2128, %v2125
  %v2288 = vpack.c.b16 %v2129, %v2126
  %v2289 = vpack.c.b16 %v2130, %v2127
  %v2290 = vpack.c.b16 %v2134, %v2131
  %v2291 = vpack.c.b16 %v2135, %v2132
  %v2292 = vpack.c.b16 %v2136, %v2133
  %v2293 = vpack.c.b16 %v2140, %v2137
  %v2294 = vpack.c.b16 %v2141, %v2138
  %v2295 = vpack.c.b16 %v2142, %v2139
  %v2296 = vpack.c.b16 %v2146, %v2143
  %v2297 = vpack.c.b16 %v2147, %v2144
  %v2298 = vpack.c.b16 %v2148, %v2145
  %v2299 = vpack.c.b16 %v2152, %v2149
  %v2300 = vpack.c.b16 %v2153, %v2150
  %v2301 = vpack.c.b16 %v2154, %v2151
  %v2302 = vpack.c.b16 %v2158, %v2155
  %v2303 = vpack.c.b16 %v2159, %v2156
  %v2304 = vpack.c.b16 %v2160, %v2157
  %v2305 = vpack.c.b16 %v2164, %v2161
  %v2306 = vpack.c.b16 %v2165, %v2162
  %v2307 = vpack.c.b16 %v2166, %v2163
  %v2308 = vpack.c.b16 %v2170, %v2167
  %v2309 = vpack.c.b16 %v2171, %v2168
  %v2310 = vpack.c.b16 %v2172, %v2169
  %v2311 = vpack.c.b16 %v2176, %v2173
  %v2312 = vpack.c.b16 %v2177, %v2174
  %v2313 = vpack.c.b16 %v2178, %v2175
  %v2314 = vpack.c.b16 %v2182, %v2179
  %v2315 = vpack.c.b16 %v2183, %v2180
  %v2316 = vpack.c.b16 %v2184, %v2181
  %v2317 = vpack.c.b16 %v2188, %v2185
  %v2318 = vpack.c.b16 %v2189, %v2186
  %v2319 = vpack.c.b16 %v2190, %v2187
  %v2320 = vpack.c.b16 %v2194, %v2191
  %v2321 = vpack.c.b16 %v2195, %v2192
  %v2322 = vpack.c.b16 %v2196, %v2193
  %v2323 = vpack.c.b16 %v2200, %v2197
  %v2324 = vpack.c.b16 %v2201, %v2198
  %v2325 = vpack.c.b16 %v2202, %v2199
  %v2326 = vpack.c.b16 %v2206, %v2203
  %v2327 = vpack.c.b16 %v2207, %v2204
  %v2328 = vpack.c.b16 %v2208, %v2205
  %v2329 = vpack.c.b16 %v2212, %v2209
  %v2330 = vpack.c.b16 %v2213, %v2210
  %v2331 = vpack.c.b16 %v2214, %v2211
  %v2332 = vpack.c.b16 %v2218, %v2215
  %v2333 = vpack.c.b16 %v2219, %v2216
  %v2334 = vpack.c.b16 %v2220, %v2217
  %v2335 = vpack.c.b16 %v2224, %v2221
  %v2336 = vpack.c.b16 %v2225, %v2222
  %v2337 = vpack.c.b16 %v2226, %v2223
  %v2338 = vpack.c.b16 %v2230, %v2227
  %v2339 = vpack.c.b16 %v2231, %v2228
  %v2340 = vpack.c.b16 %v2232, %v2229
  %v2341 = vpack.c.b16 %v2236, %v2233
  %v2342 = vpack.c.b16 %v2237, %v2234
  %v2343 = vpack.c.b16 %v2238, %v2235
  %v2344 = vpack.c.b16 %v2242, %v2239
  %v2345 = vpack.c.b16 %v2243, %v2240
  %v2346 = vpack.c.b16 %v2244, %v2241
  %v2347 = vpack.c.b16 %v2248, %v2245
  %v2348 = vpack.c.b16 %v2249, %v2246
  %v2349 = vpack.c.b16 %v2250, %v2247
  %v2350 = vpack.c.b16 %v2254, %v2251
  %v2351 = vpack.c.b16 %v2255, %v2252
  %v2352 = vpack.c.b16 %v2256, %v2253
  %2449 = vmatprep.subr.bf16.mxu0 %v2258
  %2450 = vmatpush1.bf16.msra.mxu0 %v2257
  %2451 = vmatprep.subr.bf16.mxu0 %v2261
  %2452 = vmatpush1.bf16.msra.mxu0 %v2260
  %2453 = vmatprep.subr.bf16.mxu0 %v2264
  %2454 = vmatpush1.bf16.msra.mxu0 %v2263
  %2455 = vmatprep.subr.bf16.mxu0 %v2267
  %2456 = vmatpush1.bf16.msra.mxu0 %v2266
  %2457 = vmatprep.subr.bf16.mxu0 %v2270
  %2458 = vmatpush1.bf16.msra.mxu0 %v2269
  %2459 = vmatprep.subr.bf16.mxu0 %v2273
  %2460 = vmatpush1.bf16.msra.mxu0 %v2272
  %2461 = vmatprep.subr.bf16.mxu0 %v2276
  %2462 = vmatpush1.bf16.msra.mxu0 %v2275
  %2463 = vmatprep.subr.bf16.mxu0 %v2279
  %2464 = vmatpush1.bf16.msra.mxu0 %v2278
  %2465 = vmatprep.subr.bf16.mxu0 %v2282
  %2466 = vmatpush1.bf16.msra.mxu0 %v2281
  %2467 = vmatprep.subr.bf16.mxu0 %v2285
  %2468 = vmatpush1.bf16.msra.mxu0 %v2284
  %2469 = vmatprep.subr.bf16.mxu0 %v2288
  %2470 = vmatpush1.bf16.msra.mxu0 %v2287
  %2471 = vmatprep.subr.bf16.mxu0 %v2291
  %2472 = vmatpush1.bf16.msra.mxu0 %v2290
  %2473 = vmatprep.subr.bf16.mxu0 %v2294
  %2474 = vmatpush1.bf16.msra.mxu0 %v2293
  %2475 = vmatprep.subr.bf16.mxu0 %v2297
  %2476 = vmatpush1.bf16.msra.mxu0 %v2296
  %2477 = vmatprep.subr.bf16.mxu0 %v2300
  %2478 = vmatpush1.bf16.msra.mxu0 %v2299
  %2479 = vmatprep.subr.bf16.mxu0 %v2303
  %2480 = vmatpush1.bf16.msra.mxu0 %v2302
  %2481 = vmatprep.mubr.bf16.mxu0 %v1789
  %2482 = vmatmul.mubr.bf16.gmra.mrb[0].mxu0 %v1788
  %v2483 = vpop.f32.mrb[0].mxu0
  %v2484 = vadd.f32 %v1925, %v2483
  %v2485 = vpop.f32.mrb[0].mxu0
  %v2486 = vadd.f32 %v1929, %v2485
  %v2487 = vpop.f32.mrb[0].mxu0
  %v2488 = vadd.f32 %v1925, %v2487
  %v2489 = vpop.f32.mrb[0].mxu0
  %v2490 = vadd.f32 %v1929, %v2489
  %2491 = vdwg.mxu0
  %2492 = vmatprep.subr.bf16.mxu0 %v2306
  %2493 = vmatpush1.bf16.msra.mxu0 %v2305
  %2494 = vmatprep.subr.bf16.mxu0 %v2309
  %2495 = vmatpush1.bf16.msra.mxu0 %v2308
  %2496 = vmatprep.subr.bf16.mxu0 %v2312
  %2497 = vmatpush1.bf16.msra.mxu0 %v2311
  %2498 = vmatprep.subr.bf16.mxu0 %v2315
  %2499 = vmatpush1.bf16.msra.mxu0 %v2314
  %2500 = vmatprep.subr.bf16.mxu0 %v2318
  %2501 = vmatpush1.bf16.msra.mxu0 %v2317
  %2502 = vmatprep.subr.bf16.mxu0 %v2321
  %2503 = vmatpush1.bf16.msra.mxu0 %v2320
  %2504 = vmatprep.subr.bf16.mxu0 %v2324
  %2505 = vmatpush1.bf16.msra.mxu0 %v2323
  %2506 = vmatprep.subr.bf16.mxu0 %v2327
  %2507 = vmatpush1.bf16.msra.mxu0 %v2326
  %2508 = vmatprep.subr.bf16.mxu0 %v2330
  %2509 = vmatpush1.bf16.msra.mxu0 %v2329
  %2510 = vmatprep.subr.bf16.mxu0 %v2333
  %2511 = vmatpush1.bf16.msra.mxu0 %v2332
  %2512 = vmatprep.subr.bf16.mxu0 %v2336
  %2513 = vmatpush1.bf16.msra.mxu0 %v2335
  %2514 = vmatprep.subr.bf16.mxu0 %v2339
  %2515 = vmatpush1.bf16.msra.mxu0 %v2338
  %2516 = vmatprep.subr.bf16.mxu0 %v2342
  %2517 = vmatpush1.bf16.msra.mxu0 %v2341
  %2518 = vmatprep.subr.bf16.mxu0 %v2345
  %2519 = vmatpush1.bf16.msra.mxu0 %v2344
  %2520 = vmatprep.subr.bf16.mxu0 %v2348
  %2521 = vmatpush1.bf16.msra.mxu0 %v2347
  %2522 = vmatprep.subr.bf16.mxu0 %v2351
  %2523 = vmatpush1.bf16.msra.mxu0 %v2350
  %2524 = vmatprep.mubr.bf16.mxu0 %v1791
  %2525 = vmatmul.mubr.bf16.gmra.mrb[0].mxu0 %v1790
  %v2526 = vpop.f32.mrb[0].mxu0
  %v2527 = vadd.f32 %v2484, %v2526
  %v2528 = vpop.f32.mrb[0].mxu0
  %v2529 = vadd.f32 %v2486, %v2528
  %v2530 = vpop.f32.mrb[0].mxu0
  %v2531 = vadd.f32 %v2488, %v2530
  %v2532 = vpop.f32.mrb[0].mxu0
  %v2533 = vadd.f32 %v2490, %v2532
  %2534 = vdwg.mxu0
  %2535 = vmatprep.subr.bf16.mxu0 0
  %2536 = vmatpush1.bf16.msra.mxu0 %v2259
  %2537 = vmatprep.subr.bf16.mxu0 0
  %2538 = vmatpush1.bf16.msra.mxu0 %v2262
  %2539 = vmatprep.subr.bf16.mxu0 0
  %2540 = vmatpush1.bf16.msra.mxu0 %v2265
  %2541 = vmatprep.subr.bf16.mxu0 0
  %2542 = vmatpush1.bf16.msra.mxu0 %v2268
  %2543 = vmatprep.subr.bf16.mxu0 0
  %2544 = vmatpush1.bf16.msra.mxu0 %v2271
  %2545 = vmatprep.subr.bf16.mxu0 0
  %2546 = vmatpush1.bf16.msra.mxu0 %v2274
  %2547 = vmatprep.subr.bf16.mxu0 0
  %2548 = vmatpush1.bf16.msra.mxu0 %v2277
  %2549 = vmatprep.subr.bf16.mxu0 0
  %2550 = vmatpush1.bf16.msra.mxu0 %v2280
  %2551 = vmatprep.subr.bf16.mxu0 0
  %2552 = vmatpush1.bf16.msra.mxu0 %v2283
  %2553 = vmatprep.subr.bf16.mxu0 0
  %2554 = vmatpush1.bf16.msra.mxu0 %v2286
  %2555 = vmatprep.subr.bf16.mxu0 0
  %2556 = vmatpush1.bf16.msra.mxu0 %v2289
  %2557 = vmatprep.subr.bf16.mxu0 0
  %2558 = vmatpush1.bf16.msra.mxu0 %v2292
  %2559 = vmatprep.subr.bf16.mxu0 0
  %2560 = vmatpush1.bf16.msra.mxu0 %v2295
  %2561 = vmatprep.subr.bf16.mxu0 0
  %2562 = vmatpush1.bf16.msra.mxu0 %v2298
  %2563 = vmatprep.subr.bf16.mxu0 0
  %2564 = vmatpush1.bf16.msra.mxu0 %v2301
  %2565 = vmatprep.subr.bf16.mxu0 0
  %2566 = vmatpush1.bf16.msra.mxu0 %v2304
  %2567 = vmatprep.mubr.bf16.mxu0 %v1789
  %2568 = vmatmul.mubr.bf16.gmra.mrb[0].mxu0 %v1788
  %v2569 = vpop.f32.mrb[0].mxu0
  %v2570 = vadd.f32 %v1933, %v2569
  %v2571 = vpop.f32.mrb[0].mxu0
  %v2572 = vpop.f32.mrb[0].mxu0
  %v2573 = vadd.f32 %v1933, %v2572
  %v2574 = vpop.f32.mrb[0].mxu0
  %2575 = vdwg.mxu0
  %2576 = vmatprep.subr.bf16.mxu0 0
  %2577 = vmatpush1.bf16.msra.mxu0 %v2307
  %2578 = vmatprep.subr.bf16.mxu0 0
  %2579 = vmatpush1.bf16.msra.mxu0 %v2310
  %2580 = vmatprep.subr.bf16.mxu0 0
  %2581 = vmatpush1.bf16.msra.mxu0 %v2313
  %2582 = vmatprep.subr.bf16.mxu0 0
  %2583 = vmatpush1.bf16.msra.mxu0 %v2316
  %2584 = vmatprep.subr.bf16.mxu0 0
  %2585 = vmatpush1.bf16.msra.mxu0 %v2319
  %2586 = vmatprep.subr.bf16.mxu0 0
  %2587 = vmatpush1.bf16.msra.mxu0 %v2322
  %2588 = vmatprep.subr.bf16.mxu0 0
  %2589 = vmatpush1.bf16.msra.mxu0 %v2325
  %2590 = vmatprep.subr.bf16.mxu0 0
  %2591 = vmatpush1.bf16.msra.mxu0 %v2328
  %2592 = vmatprep.subr.bf16.mxu0 0
  %2593 = vmatpush1.bf16.msra.mxu0 %v2331
  %2594 = vmatprep.subr.bf16.mxu0 0
  %2595 = vmatpush1.bf16.msra.mxu0 %v2334
  %2596 = vmatprep.subr.bf16.mxu0 0
  %2597 = vmatpush1.bf16.msra.mxu0 %v2337
  %2598 = vmatprep.subr.bf16.mxu0 0
  %2599 = vmatpush1.bf16.msra.mxu0 %v2340
  %2600 = vmatprep.subr.bf16.mxu0 0
  %2601 = vmatpush1.bf16.msra.mxu0 %v2343
  %2602 = vmatprep.subr.bf16.mxu0 0
  %2603 = vmatpush1.bf16.msra.mxu0 %v2346
  %2604 = vmatprep.subr.bf16.mxu0 0
  %2605 = vmatpush1.bf16.msra.mxu0 %v2349
  %2606 = vmatprep.subr.bf16.mxu0 0
  %2607 = vmatpush1.bf16.msra.mxu0 %v2352
  %2608 = vmatprep.mubr.bf16.mxu0 %v1791
  %2609 = vmatmul.mubr.bf16.gmra.mrb[0].mxu0 %v1790
  %v2610 = vpop.f32.mrb[0].mxu0
  %v2611 = vadd.f32 %v2570, %v2610
  %v2612 = vpop.f32.mrb[0].mxu0
  %v2613 = vpop.f32.mrb[0].mxu0
  %v2614 = vadd.f32 %v2573, %v2613
  %v2615 = vpop.f32.mrb[0].mxu0
  %2616 = vdwg.mxu0
  %v2617 = vmax.f32 %v2527, 0.0
  %v2618 = vmax.f32 %v2529, 0.0
  %v2619 = vmax.f32 %v2611, 0.0
  %v2620 = vmax.f32 %v2531, 0.0
  %v2621 = vmax.f32 %v2533, 0.0
  %v2622 = vmax.f32 %v2614, 0.0
  %v2623 = vpack.c.bf16 %v2620, %v2617
  %v2624 = vpack.c.bf16 %v2621, %v2618
  %v2625 = vpack.c.bf16 %v2622, %v2619
  %v2626 = vld [vmem:[%s5] sm:$0xf]
  %v2627 = vld [vmem:[%s5 + $0x4] sm:$0xf]
  %v2628 = vld [vmem:[%s5 + $0x8] sm:$0xf]
  %v2629 = vld [vmem:[%s5 + $0xc] sm:$0xf]
  %v2630 = vld [vmem:[%s5 + $0x10] sm:$0xf]
  %v2631 = vld [vmem:[%s5 + $0x14] sm:$0xf]
  %v2632 = vld [vmem:[%s5 + $0x18] sm:$0xf]
  %v2633 = vld [vmem:[%s5 + $0x1c] sm:$0xf]
  %v2634 = vld [vmem:[%s5 + $0x20] sm:$0xf]
  %v2635 = vld [vmem:[%s5 + $0x24] sm:$0xf]
  %v2636 = vld [vmem:[%s5 + $0x28] sm:$0xf]
  %v2637 = vld [vmem:[%s5 + $0x2c] sm:$0xf]
  %v2638 = vld [vmem:[%s5 + $0x30] sm:$0xf]
  %v2639 = vld [vmem:[%s5 + $0x34] sm:$0xf]
  %v2640 = vld [vmem:[%s5 + $0x38] sm:$0xf]
  %v2641 = vld [vmem:[%s5 + $0x3c] sm:$0xf]
  %v2642 = vld [vmem:[%s5 + $0x40] sm:$0xf]
  %v2643 = vld [vmem:[%s5 + $0x44] sm:$0xf]
  %v2644 = vld [vmem:[%s5 + $0x48] sm:$0xf]
  %v2645 = vld [vmem:[%s5 + $0x4c] sm:$0xf]
  %v2646 = vld [vmem:[%s5 + $0x50] sm:$0xf]
  %v2647 = vld [vmem:[%s5 + $0x54] sm:$0xf]
  %v2648 = vld [vmem:[%s5 + $0x58] sm:$0xf]
  %v2649 = vld [vmem:[%s5 + $0x5c] sm:$0xf]
  %v2650 = vld [vmem:[%s5 + $0x60] sm:$0xf]
  %v2651 = vld [vmem:[%s5 + $0x64] sm:$0xf]
  %v2652 = vld [vmem:[%s5 + $0x68] sm:$0xf]
  %v2653 = vld [vmem:[%s5 + $0x6c] sm:$0xf]
  %v2654 = vld [vmem:[%s5 + $0x70] sm:$0xf]
  %v2655 = vld [vmem:[%s5 + $0x74] sm:$0xf]
  %v2656 = vld [vmem:[%s5 + $0x78] sm:$0xf]
  %v2657 = vld [vmem:[%s5 + $0x7c] sm:$0xf]
  %v2658 = vld [vmem:[%s5 + $0x80] sm:$0xf]
  %v2659 = vld [vmem:[%s5 + $0x84] sm:$0xf]
  %v2660 = vld [vmem:[%s5 + $0x88] sm:$0xf]
  %v2661 = vld [vmem:[%s5 + $0x8c] sm:$0xf]
  %v2662 = vld [vmem:[%s5 + $0x90] sm:$0xf]
  %v2663 = vld [vmem:[%s5 + $0x94] sm:$0xf]
  %v2664 = vld [vmem:[%s5 + $0x98] sm:$0xf]
  %v2665 = vld [vmem:[%s5 + $0x9c] sm:$0xf]
  %v2666 = vld [vmem:[%s5 + $0xa0] sm:$0xf]
  %v2667 = vld [vmem:[%s5 + $0xa4] sm:$0xf]
  %v2668 = vld [vmem:[%s5 + $0xa8] sm:$0xf]
  %v2669 = vld [vmem:[%s5 + $0xac] sm:$0xf]
  %v2670 = vld [vmem:[%s5 + $0xb0] sm:$0xf]
  %v2671 = vld [vmem:[%s5 + $0xb4] sm:$0xf]
  %v2672 = vld [vmem:[%s5 + $0xb8] sm:$0xf]
  %v2673 = vld [vmem:[%s5 + $0xbc] sm:$0xf]
  %v2674 = vld [vmem:[%s6] sm:$0x1]
  %v2676 = vlaneseq
  %v2677 = vshrl.u32 %v2676, 7
  %v2678 = vsub.s32 0, %v2677
  %v2679 = vrot.slane %v2674, %v2678
  %v2729 = vunpack.c.l.b16 %v2626
  %v2730 = vunpack.c.l.b16 %v2627
  %v2731 = vunpack.c.l.b16 %v2628
  %v2732 = vunpack.c.l.b16 %v2629
  %v2733 = vunpack.c.l.b16 %v2630
  %v2734 = vunpack.c.l.b16 %v2631
  %v2735 = vunpack.c.l.b16 %v2632
  %v2736 = vunpack.c.l.b16 %v2633
  %v2737 = vunpack.c.l.b16 %v2634
  %v2738 = vunpack.c.l.b16 %v2635
  %v2739 = vunpack.c.l.b16 %v2636
  %v2740 = vunpack.c.l.b16 %v2637
  %v2741 = vunpack.c.l.b16 %v2638
  %v2742 = vunpack.c.l.b16 %v2639
  %v2743 = vunpack.c.l.b16 %v2640
  %v2744 = vunpack.c.l.b16 %v2641
  %v2745 = vunpack.c.l.b16 %v2642
  %v2746 = vunpack.c.l.b16 %v2643
  %v2747 = vunpack.c.l.b16 %v2644
  %v2748 = vunpack.c.l.b16 %v2645
  %v2749 = vunpack.c.l.b16 %v2646
  %v2750 = vunpack.c.l.b16 %v2647
  %v2751 = vunpack.c.l.b16 %v2648
  %v2752 = vunpack.c.l.b16 %v2649
  %v2753 = vunpack.c.l.b16 %v2650
  %v2754 = vunpack.c.l.b16 %v2651
  %v2755 = vunpack.c.l.b16 %v2652
  %v2756 = vunpack.c.l.b16 %v2653
  %v2757 = vunpack.c.l.b16 %v2654
  %v2758 = vunpack.c.l.b16 %v2655
  %v2759 = vunpack.c.l.b16 %v2656
  %v2760 = vunpack.c.l.b16 %v2657
  %v2761 = vunpack.c.l.b16 %v2658
  %v2762 = vunpack.c.l.b16 %v2659
  %v2763 = vunpack.c.l.b16 %v2660
  %v2764 = vunpack.c.l.b16 %v2661
  %v2765 = vunpack.c.l.b16 %v2662
  %v2766 = vunpack.c.l.b16 %v2663
  %v2767 = vunpack.c.l.b16 %v2664
  %v2768 = vunpack.c.l.b16 %v2665
  %v2769 = vunpack.c.l.b16 %v2666
  %v2770 = vunpack.c.l.b16 %v2667
  %v2771 = vunpack.c.l.b16 %v2668
  %v2772 = vunpack.c.l.b16 %v2669
  %v2773 = vunpack.c.l.b16 %v2670
  %v2774 = vunpack.c.l.b16 %v2671
  %v2775 = vunpack.c.l.b16 %v2672
  %v2776 = vunpack.c.l.b16 %v2673
  %v2777 = vpack.c.b16 %v2730, %v2729
  %v2778 = vpack.c.b16 %v2732, %v2731
  %v2779 = vpack.c.b16 %v2734, %v2733
  %v2780 = vpack.c.b16 %v2736, %v2735
  %v2781 = vpack.c.b16 %v2738, %v2737
  %v2782 = vpack.c.b16 %v2740, %v2739
  %v2783 = vpack.c.b16 %v2742, %v2741
  %v2784 = vpack.c.b16 %v2744, %v2743
  %v2785 = vpack.c.b16 %v2746, %v2745
  %v2786 = vpack.c.b16 %v2748, %v2747
  %v2787 = vpack.c.b16 %v2750, %v2749
  %v2788 = vpack.c.b16 %v2752, %v2751
  %v2789 = vpack.c.b16 %v2754, %v2753
  %v2790 = vpack.c.b16 %v2756, %v2755
  %v2791 = vpack.c.b16 %v2758, %v2757
  %v2792 = vpack.c.b16 %v2760, %v2759
  %v2793 = vpack.c.b16 %v2762, %v2761
  %v2794 = vpack.c.b16 %v2764, %v2763
  %v2795 = vpack.c.b16 %v2766, %v2765
  %v2796 = vpack.c.b16 %v2768, %v2767
  %v2797 = vpack.c.b16 %v2770, %v2769
  %v2798 = vpack.c.b16 %v2772, %v2771
  %v2799 = vpack.c.b16 %v2774, %v2773
  %v2800 = vpack.c.b16 %v2776, %v2775
  %2825 = vmatprep.subr.bf16.mxu0 0
  %2826 = vmatpush1.bf16.msra.mxu0 %v2777
  %2827 = vmatprep.subr.bf16.mxu0 0
  %2828 = vmatpush1.bf16.msra.mxu0 %v2778
  %2829 = vmatprep.subr.bf16.mxu0 0
  %2830 = vmatpush1.bf16.msra.mxu0 %v2779
  %2831 = vmatprep.subr.bf16.mxu0 0
  %2832 = vmatpush1.bf16.msra.mxu0 %v2780
  %2833 = vmatprep.subr.bf16.mxu0 0
  %2834 = vmatpush1.bf16.msra.mxu0 %v2781
  %2835 = vmatprep.subr.bf16.mxu0 0
  %2836 = vmatpush1.bf16.msra.mxu0 %v2782
  %2837 = vmatprep.subr.bf16.mxu0 0
  %2838 = vmatpush1.bf16.msra.mxu0 %v2783
  %2839 = vmatprep.subr.bf16.mxu0 0
  %2840 = vmatpush1.bf16.msra.mxu0 %v2784
  %2841 = vmatprep.subr.bf16.mxu0 0
  %2842 = vmatpush1.bf16.msra.mxu0 %v2785
  %2843 = vmatprep.subr.bf16.mxu0 0
  %2844 = vmatpush1.bf16.msra.mxu0 %v2786
  %2845 = vmatprep.subr.bf16.mxu0 0
  %2846 = vmatpush1.bf16.msra.mxu0 %v2787
  %2847 = vmatprep.subr.bf16.mxu0 0
  %2848 = vmatpush1.bf16.msra.mxu0 %v2788
  %2849 = vmatprep.subr.bf16.mxu0 0
  %2850 = vmatpush1.bf16.msra.mxu0 %v2789
  %2851 = vmatprep.subr.bf16.mxu0 0
  %2852 = vmatpush1.bf16.msra.mxu0 %v2790
  %2853 = vmatprep.subr.bf16.mxu0 0
  %2854 = vmatpush1.bf16.msra.mxu0 %v2791
  %2855 = vmatprep.subr.bf16.mxu0 0
  %2856 = vmatpush1.bf16.msra.mxu0 %v2792
  %2857 = vmatprep.mubr.bf16.mxu0 %v2624
  %2858 = vmatmul.mubr.bf16.gmra.mrb[0].mxu0 %v2623
  %v2859 = vpop.f32.mrb[0].mxu0
  %v2860 = vadd.f32 %v2679, %v2859
  %v2861 = vpop.f32.mrb[0].mxu0
  %v2862 = vpop.f32.mrb[0].mxu0
  %v2863 = vadd.f32 %v2679, %v2862
  %v2864 = vpop.f32.mrb[0].mxu0
  %2865 = vdwg.mxu0
  %2866 = vmatprep.subr.bf16.mxu0 0
  %2867 = vmatpush1.bf16.msra.mxu0 %v2793
  %2868 = vmatprep.subr.bf16.mxu0 0
  %2869 = vmatpush1.bf16.msra.mxu0 %v2794
  %2870 = vmatprep.subr.bf16.mxu0 0
  %2871 = vmatpush1.bf16.msra.mxu0 %v2795
  %2872 = vmatprep.subr.bf16.mxu0 0
  %2873 = vmatpush1.bf16.msra.mxu0 %v2796
  %2874 = vmatprep.subr.bf16.mxu0 0
  %2875 = vmatpush1.bf16.msra.mxu0 %v2797
  %2876 = vmatprep.subr.bf16.mxu0 0
  %2877 = vmatpush1.bf16.msra.mxu0 %v2798
  %2878 = vmatprep.subr.bf16.mxu0 0
  %2879 = vmatpush1.bf16.msra.mxu0 %v2799
  %2880 = vmatprep.subr.bf16.mxu0 0
  %2881 = vmatpush1.bf16.msra.mxu0 %v2800
  %2882 = vmatprep.subr.bf16.mxu0 0
  %2883 = vmatpush1.bf16.msra.mxu0 0
  %2884 = vmatprep.subr.bf16.mxu0 0
  %2885 = vmatpush1.bf16.msra.mxu0 0
  %2886 = vmatprep.subr.bf16.mxu0 0
  %2887 = vmatpush1.bf16.msra.mxu0 0
  %2888 = vmatprep.subr.bf16.mxu0 0
  %2889 = vmatpush1.bf16.msra.mxu0 0
  %2890 = vmatprep.subr.bf16.mxu0 0
  %2891 = vmatpush1.bf16.msra.mxu0 0
  %2892 = vmatprep.subr.bf16.mxu0 0
  %2893 = vmatpush1.bf16.msra.mxu0 0
  %2894 = vmatprep.subr.bf16.mxu0 0
  %2895 = vmatpush1.bf16.msra.mxu0 0
  %2896 = vmatprep.subr.bf16.mxu0 0
  %2897 = vmatpush1.bf16.msra.mxu0 0
  %2898 = vmatprep.mubr.bf16.mxu0 0
  %2899 = vmatmul.mubr.bf16.gmra.mrb[0].mxu0 %v2625
  %v2900 = vpop.f32.mrb[0].mxu0
  %v2901 = vadd.f32 %v2860, %v2900
  %v2902 = vpop.f32.mrb[0].mxu0
  %v2903 = vpop.f32.mrb[0].mxu0
  %v2904 = vadd.f32 %v2863, %v2903
  %v2905 = vpop.f32.mrb[0].mxu0
  %2906 = vdwg.mxu0
  %2907 = vst [vmem:[%s7] sm:$0xff] %v2901
  %2908 = vst [vmem:[%s7 + $0x8] sm:$0xff] %v2904
  // Predicated region
  $region30: #{_lambda_.1} parent=0 // pred_check
    _
  $region31: #{_lambda_.1} parent=0 // pred_check_branch
    %2910 = sbr.rel (0) target = $region33
  $region32: #{_lambda_.1} parent=0 // pred_region
    _
  $region33: #{_lambda_.1} parent=0 // pred_fallthru
    _
  // Predicated region
  $region34: #{_lambda_.1} parent=0 // pred_check
    _
  $region35: #{_lambda_.1} parent=0 // pred_check_branch
    %2912 = sbr.rel (0) target = $region37
  $region36: #{_lambda_.1} parent=0 // pred_region
    _
  $region37: #{_lambda_.1} parent=0 // pred_fallthru
    _

</llo_original>
